<compile_context>
chip_gen: v7x
topology: tpu7x:2x2x1
jax: 0.10.0
libtpu: 0.0.40
codegen_flags: <defaults>
</compile_context>

<pallas_src>
import math
import functools

import jax
import jax.numpy as jnp
from jax import lax
from jax.experimental import pallas as pl
from jax.experimental.pallas import tpu as pltpu


# ------------------------------ fused kernel ------------------------------- #

def _fused_attn_mem_kernel(q_in_ref, k_in_ref, v_in_ref,
                           wq_ref, wk_ref, wv_ref, wo_ref,
                           bq_ref, bk_ref, bv_ref, bo_ref,
                           mk_ref, mv_ref,
                           o_ref,
                           o_scratch,
                           *, d_k, d_v, h, m, b_blk, nq, nk, d_model):
    f32, bf16 = jnp.float32, jnp.bfloat16

    # ---- fused Q / K / V projections over all B_blk*nq / B_blk*nk rows ----
    # (leading-dim merge only; last dim unchanged -> cheap reshape)
    xq = q_in_ref[...].reshape(b_blk * nq, d_model).astype(bf16)
    xk = k_in_ref[...].reshape(b_blk * nk, d_model).astype(bf16)
    xv = v_in_ref[...].reshape(b_blk * nk, d_model).astype(bf16)

    # Weights are already bf16; 1/sqrt(d_k) is folded into wq / bq host-side.
    q = jnp.dot(xq, wq_ref[...], preferred_element_type=f32) + bq_ref[...]
    k = jnp.dot(xk, wk_ref[...], preferred_element_type=f32) + bk_ref[...]
    v = jnp.dot(xv, wv_ref[...], preferred_element_type=f32) + bv_ref[...]

    q_bf = q.astype(bf16)
    k_bf = k.astype(bf16)
    v_bf = v.astype(bf16)
    mk = mk_ref[...]          # (m, h*d_k) bf16, pre-scaled by sqrt(d_k)
    mv = mv_ref[...]          # (m, h*d_v) bf16, pre-scaled by sqrt(m)

    dn = (((1,), (1,)), ((), ()))      # contract on last dims (no K transpose)

    for b in range(b_blk):                                   # static unroll
        # Merge memory slots into K / V once per batch item -> a single score
        # matmul and a single PV matmul per head below.
        k_full = jnp.concatenate([k_bf[b * nk:(b + 1) * nk, :], mk], axis=0)
        v_full = jnp.concatenate([v_bf[b * nk:(b + 1) * nk, :], mv], axis=0)
        q_b = q_bf[b * nq:(b + 1) * nq, :]                   # (nq, h*d_k)

        for hi in range(h):                                  # static unroll
            q_h = q_b[:, hi * d_k:(hi + 1) * d_k]            # (nq, d_k)
            k_h = k_full[:, hi * d_k:(hi + 1) * d_k]         # (nk+m, d_k)
            v_h = v_full[:, hi * d_v:(hi + 1) * d_v]         # (nk+m, d_v)

            s = lax.dot_general(q_h, k_h, dn,
                                preferred_element_type=f32)  # (nq, nk+m)
            p = jnp.exp(s - jnp.max(s, axis=-1, keepdims=True))
            denom = jnp.sum(p, axis=-1, keepdims=True)
            o_h = jnp.dot(p.astype(bf16), v_h,
                          preferred_element_type=f32) / denom

            # Stash per-head output; projection is fused into ONE matmul below.
            o_scratch[b * nq:(b + 1) * nq, hi * d_v:(hi + 1) * d_v] = o_h

    # ---- single fused output projection over all rows and all heads ----
    out = jnp.dot(o_scratch[...].astype(bf16), wo_ref[...],
                  preferred_element_type=f32) + bo_ref[...]  # (B_blk*nq, d_model)

    o_ref[...] = out.reshape(b_blk, nq, d_model).astype(o_ref.dtype)


def _const_spec(shape):
    """BlockSpec for an array loaded whole and constant across the grid."""
    zeros = (0,) * len(shape)
    return pl.BlockSpec(shape, lambda i: zeros)


# ------------------------------ parameters ---------------------------------- #

def init_params(key, d_model, d_k, d_v, h, m):
    def xavier_uniform_t(key, d_in, d_out):
        # xavier_uniform_ of a (d_out, d_in) Linear weight, stored pre-transposed
        # as (d_in, d_out) so the kernel never transposes an operand.
        bound = math.sqrt(6.0 / (d_in + d_out))
        return jax.random.uniform(key, (d_in, d_out), jnp.float32, -bound, bound)

    k1, k2, k3, k4, k5, k6 = jax.random.split(key, 6)
    return {
        "WqT": xavier_uniform_t(k1, d_model, h * d_k),
        "bq": jnp.zeros((1, h * d_k), jnp.float32),
        "WkT": xavier_uniform_t(k2, d_model, h * d_k),
        "bk": jnp.zeros((1, h * d_k), jnp.float32),
        "WvT": xavier_uniform_t(k3, d_model, h * d_v),
        "bv": jnp.zeros((1, h * d_v), jnp.float32),
        "WoT": xavier_uniform_t(k4, h * d_v, d_model),
        "bo": jnp.zeros((1, d_model), jnp.float32),
        "m_k": (1.0 / d_k) * jax.random.normal(k5, (1, m, h * d_k), jnp.float32),
        "m_v": (1.0 / m) * jax.random.normal(k6, (1, m, h * d_v), jnp.float32),
    }


def prepare_params(params, d_k, d_v, h, m):
    """One-time host-side prep: bf16 weights, pre-scaled memory slots, and
    1/sqrt(d_k) folded into the query projection."""
    bf16 = jnp.bfloat16
    inv = 1.0 / math.sqrt(d_k)
    return {
        "WqT": (params["WqT"] * inv).astype(bf16),
        "bq": params["bq"] * inv,                               # f32 bias
        "WkT": params["WkT"].astype(bf16),
        "bk": params["bk"],
        "WvT": params["WvT"].astype(bf16),
        "bv": params["bv"],
        "WoT": params["WoT"].astype(bf16),
        "bo": params["bo"],
        "m_k": (params["m_k"][0] * math.sqrt(d_k)).astype(bf16),  # (m, h*d_k)
        "m_v": (params["m_v"][0] * math.sqrt(m)).astype(bf16),    # (m, h*d_v)
    }


# ------------------------------ module wrapper ------------------------------ #

def _pick_b_blk(b_s, nq, nk, d_model, h, d_k, d_v, m,
                budget_bytes=8 * 1024 * 1024):
    """Largest divisor of b_s whose rough per-step working set fits a budget."""
    per_item = 4 * (nq * d_model + 2 * nk * d_model
                    + nq * h * d_k + (nk + m) * h * d_k + (nk + m) * h * d_v
                    + nq * (nk + m)
                    + nq * h * d_v + nq * d_model)
    per_item = int(per_item * 3)          # bf16 copies + double-buffered blocks
    b_blk = max(1, min(b_s, budget_bytes // max(per_item, 1)))
    while b_s % b_blk:
        b_blk -= 1
    return b_blk


def scaled_dot_product_attention_memory(prepared, queries, keys, values,
                                        d_k, d_v, h, m, b_blk=None):
    b_s, nq, d_model = queries.shape
    nk = keys.shape[1]

    if b_blk is None:
        b_blk = _pick_b_blk(b_s, nq, nk, d_model, h, d_k, d_v, m)
    assert b_s % b_blk == 0

    kernel = functools.partial(_fused_attn_mem_kernel,
                               d_k=d_k, d_v=d_v, h=h, m=m,
                               b_blk=b_blk, nq=nq, nk=nk, d_model=d_model)

    return pl.pallas_call(
        kernel,
        out_shape=jax.ShapeDtypeStruct((b_s, nq, d_model), queries.dtype),
        grid=(b_s // b_blk,),
        in_specs=[
            pl.BlockSpec((b_blk, nq, d_model), lambda i: (i, 0, 0)),  # queries
            pl.BlockSpec((b_blk, nk, d_model), lambda i: (i, 0, 0)),  # keys
            pl.BlockSpec((b_blk, nk, d_model), lambda i: (i, 0, 0)),  # values
            _const_spec((d_model, h * d_k)),                          # WqT (bf16)
            _const_spec((d_model, h * d_k)),                          # WkT (bf16)
            _const_spec((d_model, h * d_v)),                          # WvT (bf16)
            _const_spec((h * d_v, d_model)),                          # WoT (bf16)
            _const_spec((1, h * d_k)),                                # bq
            _const_spec((1, h * d_k)),                                # bk
            _const_spec((1, h * d_v)),                                # bv
            _const_spec((1, d_model)),                                # bo
            _const_spec((m, h * d_k)),                                # m_k (bf16)
            _const_spec((m, h * d_v)),                                # m_v (bf16)
        ],
        out_specs=pl.BlockSpec((b_blk, nq, d_model), lambda i: (i, 0, 0)),
        scratch_shapes=[pltpu.VMEM((b_blk * nq, h * d_v), jnp.float32)],
        compiler_params=pltpu.CompilerParams(
            dimension_semantics=("parallel",),
            vmem_limit_bytes=48 * 1024 * 1024),
    )(queries, keys, values,
      prepared["WqT"], prepared["WkT"], prepared["WvT"], prepared["WoT"],
      prepared["bq"], prepared["bk"], prepared["bv"], prepared["bo"],
      prepared["m_k"], prepared["m_v"])


# ------------------------------ pure-JAX reference -------------------------- #

def reference_forward(params, queries, keys, values, d_k, d_v, h, m):
    """Pure-JAX f32 reference mirroring the PyTorch forward (mask/weights = None)."""
    b_s, nq, _ = queries.shape
    nk = keys.shape[1]
    q = queries @ params["WqT"] + params["bq"]
    k = keys @ params["WkT"] + params["bk"]
    v = values @ params["WvT"] + params["bv"]
    m_k = math.sqrt(d_k) * jnp.broadcast_to(params["m_k"], (b_s, m, h * d_k))
    m_v = math.sqrt(m) * jnp.broadcast_to(params["m_v"], (b_s, m, h * d_v))
    k = jnp.concatenate([k, m_k], 1).reshape(b_s, nk + m, h, d_k).transpose(0, 2, 3, 1)
    v = jnp.concatenate([v, m_v], 1).reshape(b_s, nk + m, h, d_v).transpose(0, 2, 1, 3)
    qh = q.reshape(b_s, nq, h, d_k).transpose(0, 2, 1, 3)
    att = jnp.einsum("bhqd,bhdk->bhqk", qh, k) / math.sqrt(d_k)
    att = jax.nn.softmax(att, axis=-1)
    out = jnp.einsum("bhqk,bhkd->bhqd", att, v).transpose(0, 2, 1, 3)
    out = out.reshape(b_s, nq, h * d_v)
    return out @ params["WoT"] + params["bo"]


if __name__ == "__main__":
    d_model, d_k, d_v, h, m = 32, 16, 16, 4, 8
    b_s, nq, nk = 2, 8, 8

    key = jax.random.PRNGKey(0)
    kp, kq, kk, kv = jax.random.split(key, 4)
    params = init_params(kp, d_model, d_k, d_v, h, m)
    queries = jax.random.normal(kq, (b_s, nq, d_model), jnp.float32)
    keys = jax.random.normal(kk, (b_s, nk, d_model), jnp.float32)
    values = jax.random.normal(kv, (b_s, nk, d_model), jnp.float32)

    prepared = prepare_params(params, d_k, d_v, h, m)
    out = scaled_dot_product_attention_memory(
        prepared, queries, keys, values, d_k, d_v, h, m)
    out = jax.block_until_ready(out)

    ref = reference_forward(params, queries, keys, values, d_k, d_v, h, m)
    assert out.shape == (b_s, nq, d_model)
    # bf16 MXU operands -> compare against the f32 reference with bf16 tolerance.
    assert jnp.allclose(out, ref, atol=5e-2, rtol=5e-2), "mismatch vs reference"

    print("KERNEL_OK")
</pallas_src>

<mosaic_0001>
module attributes {stable_mosaic.version = 11 : i64} {
  func.func @_fused_attn_mem_kernel(%arg0: i32, %arg1: memref<2x8x32xf32, #tpu.memory_space<vmem>>, %arg2: memref<2x8x32xf32, #tpu.memory_space<vmem>>, %arg3: memref<2x8x32xf32, #tpu.memory_space<vmem>>, %arg4: memref<32x64xbf16, #tpu.memory_space<vmem>>, %arg5: memref<32x64xbf16, #tpu.memory_space<vmem>>, %arg6: memref<32x64xbf16, #tpu.memory_space<vmem>>, %arg7: memref<64x32xbf16, #tpu.memory_space<vmem>>, %arg8: memref<1x64xf32, #tpu.memory_space<vmem>>, %arg9: memref<1x64xf32, #tpu.memory_space<vmem>>, %arg10: memref<1x64xf32, #tpu.memory_space<vmem>>, %arg11: memref<1x32xf32, #tpu.memory_space<vmem>>, %arg12: memref<8x64xbf16, #tpu.memory_space<vmem>>, %arg13: memref<8x64xbf16, #tpu.memory_space<vmem>>, %arg14: memref<2x8x32xf32, #tpu.memory_space<vmem>>, %arg15: memref<16x64xf32, #tpu.memory_space<vmem>>) attributes {dimension_semantics = [#tpu.dimension_semantics<parallel>], iteration_bounds = array<i64: 1>, scalar_prefetch = 0 : i64, scratch_operands = 1 : i64, tpu.core_type = #tpu.core_type<tc>, window_params = [{transform_indices = @transform_0, window_bounds = array<i64: 2, 8, 32>}, {transform_indices = @transform_1, window_bounds = array<i64: 2, 8, 32>}, {transform_indices = @transform_2, window_bounds = array<i64: 2, 8, 32>}, {pipeline_mode = #tpu.pipeline_mode<synchronous>, transform_indices = @transform_3, window_bounds = array<i64: 32, 64>}, {pipeline_mode = #tpu.pipeline_mode<synchronous>, transform_indices = @transform_4, window_bounds = array<i64: 32, 64>}, {pipeline_mode = #tpu.pipeline_mode<synchronous>, transform_indices = @transform_5, window_bounds = array<i64: 32, 64>}, {pipeline_mode = #tpu.pipeline_mode<synchronous>, transform_indices = @transform_6, window_bounds = array<i64: 64, 32>}, {pipeline_mode = #tpu.pipeline_mode<synchronous>, transform_indices = @transform_7, window_bounds = array<i64: 1, 64>}, {pipeline_mode = #tpu.pipeline_mode<synchronous>, transform_indices = @transform_8, window_bounds = array<i64: 1, 64>}, {pipeline_mode = #tpu.pipeline_mode<synchronous>, transform_indices = @transform_9, window_bounds = array<i64: 1, 64>}, {pipeline_mode = #tpu.pipeline_mode<synchronous>, transform_indices = @transform_10, window_bounds = array<i64: 1, 32>}, {pipeline_mode = #tpu.pipeline_mode<synchronous>, transform_indices = @transform_11, window_bounds = array<i64: 8, 64>}, {pipeline_mode = #tpu.pipeline_mode<synchronous>, transform_indices = @transform_12, window_bounds = array<i64: 8, 64>}, {transform_indices = @transform_13, window_bounds = array<i64: 2, 8, 32>}]} {
    %c0 = arith.constant 0 : index
    %c0_0 = arith.constant 0 : index
    %c0_1 = arith.constant 0 : index
    %0 = vector.load %arg1[%c0, %c0_0, %c0_1] : memref<2x8x32xf32, #tpu.memory_space<vmem>>, vector<2x8x32xf32>
    %1 = vector.shape_cast %0 : vector<2x8x32xf32> to vector<16x32xf32>
    %2 = arith.truncf %1 : vector<16x32xf32> to vector<16x32xbf16>
    %c0_2 = arith.constant 0 : index
    %c0_3 = arith.constant 0 : index
    %c0_4 = arith.constant 0 : index
    %3 = vector.load %arg2[%c0_2, %c0_3, %c0_4] : memref<2x8x32xf32, #tpu.memory_space<vmem>>, vector<2x8x32xf32>
    %4 = vector.shape_cast %3 : vector<2x8x32xf32> to vector<16x32xf32>
    %5 = arith.truncf %4 : vector<16x32xf32> to vector<16x32xbf16>
    %c0_5 = arith.constant 0 : index
    %c0_6 = arith.constant 0 : index
    %c0_7 = arith.constant 0 : index
    %6 = vector.load %arg3[%c0_5, %c0_6, %c0_7] : memref<2x8x32xf32, #tpu.memory_space<vmem>>, vector<2x8x32xf32>
    %7 = vector.shape_cast %6 : vector<2x8x32xf32> to vector<16x32xf32>
    %8 = arith.truncf %7 : vector<16x32xf32> to vector<16x32xbf16>
    %c0_8 = arith.constant 0 : index
    %c0_9 = arith.constant 0 : index
    %9 = vector.load %arg4[%c0_8, %c0_9] : memref<32x64xbf16, #tpu.memory_space<vmem>>, vector<32x64xbf16>
    %cst = arith.constant dense<0.000000e+00> : vector<16x64xf32>
    %10 = tpu.matmul %2, %9, %cst {dimension_numbers = #tpu.dot_dimension_numbers<[1], [0], [0], [1], [0, 0, 1, 1], [], []>} : vector<16x32xbf16>, vector<32x64xbf16>, vector<16x64xf32> -> vector<16x64xf32>
    %c0_10 = arith.constant 0 : index
    %c0_11 = arith.constant 0 : index
    %11 = vector.load %arg8[%c0_10, %c0_11] : memref<1x64xf32, #tpu.memory_space<vmem>>, vector<1x64xf32>
    %12 = vector.broadcast %11 : vector<1x64xf32> to vector<16x64xf32>
    %13 = arith.addf %10, %12 : vector<16x64xf32>
    %c0_12 = arith.constant 0 : index
    %c0_13 = arith.constant 0 : index
    %14 = vector.load %arg5[%c0_12, %c0_13] : memref<32x64xbf16, #tpu.memory_space<vmem>>, vector<32x64xbf16>
    %cst_14 = arith.constant dense<0.000000e+00> : vector<16x64xf32>
    %15 = tpu.matmul %5, %14, %cst_14 {dimension_numbers = #tpu.dot_dimension_numbers<[1], [0], [0], [1], [0, 0, 1, 1], [], []>} : vector<16x32xbf16>, vector<32x64xbf16>, vector<16x64xf32> -> vector<16x64xf32>
    %c0_15 = arith.constant 0 : index
    %c0_16 = arith.constant 0 : index
    %16 = vector.load %arg9[%c0_15, %c0_16] : memref<1x64xf32, #tpu.memory_space<vmem>>, vector<1x64xf32>
    %17 = vector.broadcast %16 : vector<1x64xf32> to vector<16x64xf32>
    %18 = arith.addf %15, %17 : vector<16x64xf32>
    %c0_17 = arith.constant 0 : index
    %c0_18 = arith.constant 0 : index
    %19 = vector.load %arg6[%c0_17, %c0_18] : memref<32x64xbf16, #tpu.memory_space<vmem>>, vector<32x64xbf16>
    %cst_19 = arith.constant dense<0.000000e+00> : vector<16x64xf32>
    %20 = tpu.matmul %8, %19, %cst_19 {dimension_numbers = #tpu.dot_dimension_numbers<[1], [0], [0], [1], [0, 0, 1, 1], [], []>} : vector<16x32xbf16>, vector<32x64xbf16>, vector<16x64xf32> -> vector<16x64xf32>
    %c0_20 = arith.constant 0 : index
    %c0_21 = arith.constant 0 : index
    %21 = vector.load %arg10[%c0_20, %c0_21] : memref<1x64xf32, #tpu.memory_space<vmem>>, vector<1x64xf32>
    %22 = vector.broadcast %21 : vector<1x64xf32> to vector<16x64xf32>
    %23 = arith.addf %20, %22 : vector<16x64xf32>
    %24 = arith.truncf %13 : vector<16x64xf32> to vector<16x64xbf16>
    %25 = arith.truncf %18 : vector<16x64xf32> to vector<16x64xbf16>
    %26 = arith.truncf %23 : vector<16x64xf32> to vector<16x64xbf16>
    %c0_22 = arith.constant 0 : index
    %c0_23 = arith.constant 0 : index
    %27 = vector.load %arg12[%c0_22, %c0_23] : memref<8x64xbf16, #tpu.memory_space<vmem>>, vector<8x64xbf16>
    %c0_24 = arith.constant 0 : index
    %c0_25 = arith.constant 0 : index
    %28 = vector.load %arg13[%c0_24, %c0_25] : memref<8x64xbf16, #tpu.memory_space<vmem>>, vector<8x64xbf16>
    %29 = vector.extract_strided_slice %25 {offsets = [0, 0], sizes = [8, 64], strides = [1, 1]} : vector<16x64xbf16> to vector<8x64xbf16>
    %30 = tpu.concatenate %29, %27 in 0 : vector<8x64xbf16>, vector<8x64xbf16> -> vector<16x64xbf16>
    %31 = vector.extract_strided_slice %26 {offsets = [0, 0], sizes = [8, 64], strides = [1, 1]} : vector<16x64xbf16> to vector<8x64xbf16>
    %32 = tpu.concatenate %31, %28 in 0 : vector<8x64xbf16>, vector<8x64xbf16> -> vector<16x64xbf16>
    %33 = vector.extract_strided_slice %24 {offsets = [0, 0], sizes = [8, 64], strides = [1, 1]} : vector<16x64xbf16> to vector<8x64xbf16>
    %34 = vector.extract_strided_slice %33 {offsets = [0, 0], sizes = [8, 16], strides = [1, 1]} : vector<8x64xbf16> to vector<8x16xbf16>
    %35 = vector.extract_strided_slice %30 {offsets = [0, 0], sizes = [16, 16], strides = [1, 1]} : vector<16x64xbf16> to vector<16x16xbf16>
    %36 = vector.extract_strided_slice %32 {offsets = [0, 0], sizes = [16, 16], strides = [1, 1]} : vector<16x64xbf16> to vector<16x16xbf16>
    %cst_26 = arith.constant dense<0.000000e+00> : vector<8x16xf32>
    %37 = tpu.matmul %34, %35, %cst_26 {dimension_numbers = #tpu.dot_dimension_numbers<[1], [1], [0], [0], [0, 0, 1, 0], [], []>} : vector<8x16xbf16>, vector<16x16xbf16>, vector<8x16xf32> -> vector<8x16xf32>
    %cst_27 = arith.constant dense<0xFF800000> : vector<8xf32>
    %38 = vector.multi_reduction <maximumf>, %37, %cst_27 [1] : vector<8x16xf32> to vector<8xf32>
    %39 = vector.shape_cast %38 : vector<8xf32> to vector<8x1xf32>
    %40 = vector.broadcast %39 : vector<8x1xf32> to vector<8x16xf32>
    %41 = arith.subf %37, %40 : vector<8x16xf32>
    %42 = math.exp %41 : vector<8x16xf32>
    %cst_28 = arith.constant dense<0.000000e+00> : vector<8xf32>
    %43 = vector.multi_reduction <add>, %42, %cst_28 [1] : vector<8x16xf32> to vector<8xf32>
    %44 = vector.shape_cast %43 : vector<8xf32> to vector<8x1xf32>
    %45 = arith.truncf %42 : vector<8x16xf32> to vector<8x16xbf16>
    %cst_29 = arith.constant dense<0.000000e+00> : vector<8x16xf32>
    %46 = tpu.matmul %45, %36, %cst_29 {dimension_numbers = #tpu.dot_dimension_numbers<[1], [0], [0], [1], [0, 0, 1, 1], [], []>} : vector<8x16xbf16>, vector<16x16xbf16>, vector<8x16xf32> -> vector<8x16xf32>
    %47 = vector.broadcast %44 : vector<8x1xf32> to vector<8x16xf32>
    %48 = arith.divf %46, %47 : vector<8x16xf32>
    %c0_30 = arith.constant 0 : index
    %c0_31 = arith.constant 0 : index
    %49 = vector.load %arg15[%c0_30, %c0_31] : memref<16x64xf32, #tpu.memory_space<vmem>>, vector<8x16xf32>
    tpu.vector_store %arg15[%c0_30, %c0_31], %48 {strides = array<i32>} : memref<16x64xf32, #tpu.memory_space<vmem>>, vector<8x16xf32>,
    %50 = vector.extract_strided_slice %33 {offsets = [0, 16], sizes = [8, 16], strides = [1, 1]} : vector<8x64xbf16> to vector<8x16xbf16>
    %51 = vector.extract_strided_slice %30 {offsets = [0, 16], sizes = [16, 16], strides = [1, 1]} : vector<16x64xbf16> to vector<16x16xbf16>
    %52 = vector.extract_strided_slice %32 {offsets = [0, 16], sizes = [16, 16], strides = [1, 1]} : vector<16x64xbf16> to vector<16x16xbf16>
    %cst_32 = arith.constant dense<0.000000e+00> : vector<8x16xf32>
    %53 = tpu.matmul %50, %51, %cst_32 {dimension_numbers = #tpu.dot_dimension_numbers<[1], [1], [0], [0], [0, 0, 1, 0], [], []>} : vector<8x16xbf16>, vector<16x16xbf16>, vector<8x16xf32> -> vector<8x16xf32>
    %cst_33 = arith.constant dense<0xFF800000> : vector<8xf32>
    %54 = vector.multi_reduction <maximumf>, %53, %cst_33 [1] : vector<8x16xf32> to vector<8xf32>
    %55 = vector.shape_cast %54 : vector<8xf32> to vector<8x1xf32>
    %56 = vector.broadcast %55 : vector<8x1xf32> to vector<8x16xf32>
    %57 = arith.subf %53, %56 : vector<8x16xf32>
    %58 = math.exp %57 : vector<8x16xf32>
    %cst_34 = arith.constant dense<0.000000e+00> : vector<8xf32>
    %59 = vector.multi_reduction <add>, %58, %cst_34 [1] : vector<8x16xf32> to vector<8xf32>
    %60 = vector.shape_cast %59 : vector<8xf32> to vector<8x1xf32>
    %61 = arith.truncf %58 : vector<8x16xf32> to vector<8x16xbf16>
    %cst_35 = arith.constant dense<0.000000e+00> : vector<8x16xf32>
    %62 = tpu.matmul %61, %52, %cst_35 {dimension_numbers = #tpu.dot_dimension_numbers<[1], [0], [0], [1], [0, 0, 1, 1], [], []>} : vector<8x16xbf16>, vector<16x16xbf16>, vector<8x16xf32> -> vector<8x16xf32>
    %63 = vector.broadcast %60 : vector<8x1xf32> to vector<8x16xf32>
    %64 = arith.divf %62, %63 : vector<8x16xf32>
    %c0_36 = arith.constant 0 : index
    %c16 = arith.constant 16 : index
    %65 = vector.load %arg15[%c0_36, %c16] : memref<16x64xf32, #tpu.memory_space<vmem>>, vector<8x16xf32>
    tpu.vector_store %arg15[%c0_36, %c16], %64 {strides = array<i32>} : memref<16x64xf32, #tpu.memory_space<vmem>>, vector<8x16xf32>,
    %66 = vector.extract_strided_slice %33 {offsets = [0, 32], sizes = [8, 16], strides = [1, 1]} : vector<8x64xbf16> to vector<8x16xbf16>
    %67 = vector.extract_strided_slice %30 {offsets = [0, 32], sizes = [16, 16], strides = [1, 1]} : vector<16x64xbf16> to vector<16x16xbf16>
    %68 = vector.extract_strided_slice %32 {offsets = [0, 32], sizes = [16, 16], strides = [1, 1]} : vector<16x64xbf16> to vector<16x16xbf16>
    %cst_37 = arith.constant dense<0.000000e+00> : vector<8x16xf32>
    %69 = tpu.matmul %66, %67, %cst_37 {dimension_numbers = #tpu.dot_dimension_numbers<[1], [1], [0], [0], [0, 0, 1, 0], [], []>} : vector<8x16xbf16>, vector<16x16xbf16>, vector<8x16xf32> -> vector<8x16xf32>
    %cst_38 = arith.constant dense<0xFF800000> : vector<8xf32>
    %70 = vector.multi_reduction <maximumf>, %69, %cst_38 [1] : vector<8x16xf32> to vector<8xf32>
    %71 = vector.shape_cast %70 : vector<8xf32> to vector<8x1xf32>
    %72 = vector.broadcast %71 : vector<8x1xf32> to vector<8x16xf32>
    %73 = arith.subf %69, %72 : vector<8x16xf32>
    %74 = math.exp %73 : vector<8x16xf32>
    %cst_39 = arith.constant dense<0.000000e+00> : vector<8xf32>
    %75 = vector.multi_reduction <add>, %74, %cst_39 [1] : vector<8x16xf32> to vector<8xf32>
    %76 = vector.shape_cast %75 : vector<8xf32> to vector<8x1xf32>
    %77 = arith.truncf %74 : vector<8x16xf32> to vector<8x16xbf16>
    %cst_40 = arith.constant dense<0.000000e+00> : vector<8x16xf32>
    %78 = tpu.matmul %77, %68, %cst_40 {dimension_numbers = #tpu.dot_dimension_numbers<[1], [0], [0], [1], [0, 0, 1, 1], [], []>} : vector<8x16xbf16>, vector<16x16xbf16>, vector<8x16xf32> -> vector<8x16xf32>
    %79 = vector.broadcast %76 : vector<8x1xf32> to vector<8x16xf32>
    %80 = arith.divf %78, %79 : vector<8x16xf32>
    %c0_41 = arith.constant 0 : index
    %c32 = arith.constant 32 : index
    %81 = vector.load %arg15[%c0_41, %c32] : memref<16x64xf32, #tpu.memory_space<vmem>>, vector<8x16xf32>
    tpu.vector_store %arg15[%c0_41, %c32], %80 {strides = array<i32>} : memref<16x64xf32, #tpu.memory_space<vmem>>, vector<8x16xf32>,
    %82 = vector.extract_strided_slice %33 {offsets = [0, 48], sizes = [8, 16], strides = [1, 1]} : vector<8x64xbf16> to vector<8x16xbf16>
    %83 = vector.extract_strided_slice %30 {offsets = [0, 48], sizes = [16, 16], strides = [1, 1]} : vector<16x64xbf16> to vector<16x16xbf16>
    %84 = vector.extract_strided_slice %32 {offsets = [0, 48], sizes = [16, 16], strides = [1, 1]} : vector<16x64xbf16> to vector<16x16xbf16>
    %cst_42 = arith.constant dense<0.000000e+00> : vector<8x16xf32>
    %85 = tpu.matmul %82, %83, %cst_42 {dimension_numbers = #tpu.dot_dimension_numbers<[1], [1], [0], [0], [0, 0, 1, 0], [], []>} : vector<8x16xbf16>, vector<16x16xbf16>, vector<8x16xf32> -> vector<8x16xf32>
    %cst_43 = arith.constant dense<0xFF800000> : vector<8xf32>
    %86 = vector.multi_reduction <maximumf>, %85, %cst_43 [1] : vector<8x16xf32> to vector<8xf32>
    %87 = vector.shape_cast %86 : vector<8xf32> to vector<8x1xf32>
    %88 = vector.broadcast %87 : vector<8x1xf32> to vector<8x16xf32>
    %89 = arith.subf %85, %88 : vector<8x16xf32>
    %90 = math.exp %89 : vector<8x16xf32>
    %cst_44 = arith.constant dense<0.000000e+00> : vector<8xf32>
    %91 = vector.multi_reduction <add>, %90, %cst_44 [1] : vector<8x16xf32> to vector<8xf32>
    %92 = vector.shape_cast %91 : vector<8xf32> to vector<8x1xf32>
    %93 = arith.truncf %90 : vector<8x16xf32> to vector<8x16xbf16>
    %cst_45 = arith.constant dense<0.000000e+00> : vector<8x16xf32>
    %94 = tpu.matmul %93, %84, %cst_45 {dimension_numbers = #tpu.dot_dimension_numbers<[1], [0], [0], [1], [0, 0, 1, 1], [], []>} : vector<8x16xbf16>, vector<16x16xbf16>, vector<8x16xf32> -> vector<8x16xf32>
    %95 = vector.broadcast %92 : vector<8x1xf32> to vector<8x16xf32>
    %96 = arith.divf %94, %95 : vector<8x16xf32>
    %c0_46 = arith.constant 0 : index
    %c48 = arith.constant 48 : index
    %97 = vector.load %arg15[%c0_46, %c48] : memref<16x64xf32, #tpu.memory_space<vmem>>, vector<8x16xf32>
    tpu.vector_store %arg15[%c0_46, %c48], %96 {strides = array<i32>} : memref<16x64xf32, #tpu.memory_space<vmem>>, vector<8x16xf32>,
    %98 = vector.extract_strided_slice %25 {offsets = [8, 0], sizes = [8, 64], strides = [1, 1]} : vector<16x64xbf16> to vector<8x64xbf16>
    %99 = tpu.concatenate %98, %27 in 0 : vector<8x64xbf16>, vector<8x64xbf16> -> vector<16x64xbf16>
    %100 = vector.extract_strided_slice %26 {offsets = [8, 0], sizes = [8, 64], strides = [1, 1]} : vector<16x64xbf16> to vector<8x64xbf16>
    %101 = tpu.concatenate %100, %28 in 0 : vector<8x64xbf16>, vector<8x64xbf16> -> vector<16x64xbf16>
    %102 = vector.extract_strided_slice %24 {offsets = [8, 0], sizes = [8, 64], strides = [1, 1]} : vector<16x64xbf16> to vector<8x64xbf16>
    %103 = vector.extract_strided_slice %102 {offsets = [0, 0], sizes = [8, 16], strides = [1, 1]} : vector<8x64xbf16> to vector<8x16xbf16>
    %104 = vector.extract_strided_slice %99 {offsets = [0, 0], sizes = [16, 16], strides = [1, 1]} : vector<16x64xbf16> to vector<16x16xbf16>
    %105 = vector.extract_strided_slice %101 {offsets = [0, 0], sizes = [16, 16], strides = [1, 1]} : vector<16x64xbf16> to vector<16x16xbf16>
    %cst_47 = arith.constant dense<0.000000e+00> : vector<8x16xf32>
    %106 = tpu.matmul %103, %104, %cst_47 {dimension_numbers = #tpu.dot_dimension_numbers<[1], [1], [0], [0], [0, 0, 1, 0], [], []>} : vector<8x16xbf16>, vector<16x16xbf16>, vector<8x16xf32> -> vector<8x16xf32>
    %cst_48 = arith.constant dense<0xFF800000> : vector<8xf32>
    %107 = vector.multi_reduction <maximumf>, %106, %cst_48 [1] : vector<8x16xf32> to vector<8xf32>
    %108 = vector.shape_cast %107 : vector<8xf32> to vector<8x1xf32>
    %109 = vector.broadcast %108 : vector<8x1xf32> to vector<8x16xf32>
    %110 = arith.subf %106, %109 : vector<8x16xf32>
    %111 = math.exp %110 : vector<8x16xf32>
    %cst_49 = arith.constant dense<0.000000e+00> : vector<8xf32>
    %112 = vector.multi_reduction <add>, %111, %cst_49 [1] : vector<8x16xf32> to vector<8xf32>
    %113 = vector.shape_cast %112 : vector<8xf32> to vector<8x1xf32>
    %114 = arith.truncf %111 : vector<8x16xf32> to vector<8x16xbf16>
    %cst_50 = arith.constant dense<0.000000e+00> : vector<8x16xf32>
    %115 = tpu.matmul %114, %105, %cst_50 {dimension_numbers = #tpu.dot_dimension_numbers<[1], [0], [0], [1], [0, 0, 1, 1], [], []>} : vector<8x16xbf16>, vector<16x16xbf16>, vector<8x16xf32> -> vector<8x16xf32>
    %116 = vector.broadcast %113 : vector<8x1xf32> to vector<8x16xf32>
    %117 = arith.divf %115, %116 : vector<8x16xf32>
    %c8 = arith.constant 8 : index
    %c0_51 = arith.constant 0 : index
    %118 = vector.load %arg15[%c8, %c0_51] : memref<16x64xf32, #tpu.memory_space<vmem>>, vector<8x16xf32>
    tpu.vector_store %arg15[%c8, %c0_51], %117 {strides = array<i32>} : memref<16x64xf32, #tpu.memory_space<vmem>>, vector<8x16xf32>,
    %119 = vector.extract_strided_slice %102 {offsets = [0, 16], sizes = [8, 16], strides = [1, 1]} : vector<8x64xbf16> to vector<8x16xbf16>
    %120 = vector.extract_strided_slice %99 {offsets = [0, 16], sizes = [16, 16], strides = [1, 1]} : vector<16x64xbf16> to vector<16x16xbf16>
    %121 = vector.extract_strided_slice %101 {offsets = [0, 16], sizes = [16, 16], strides = [1, 1]} : vector<16x64xbf16> to vector<16x16xbf16>
    %cst_52 = arith.constant dense<0.000000e+00> : vector<8x16xf32>
    %122 = tpu.matmul %119, %120, %cst_52 {dimension_numbers = #tpu.dot_dimension_numbers<[1], [1], [0], [0], [0, 0, 1, 0], [], []>} : vector<8x16xbf16>, vector<16x16xbf16>, vector<8x16xf32> -> vector<8x16xf32>
    %cst_53 = arith.constant dense<0xFF800000> : vector<8xf32>
    %123 = vector.multi_reduction <maximumf>, %122, %cst_53 [1] : vector<8x16xf32> to vector<8xf32>
    %124 = vector.shape_cast %123 : vector<8xf32> to vector<8x1xf32>
    %125 = vector.broadcast %124 : vector<8x1xf32> to vector<8x16xf32>
    %126 = arith.subf %122, %125 : vector<8x16xf32>
    %127 = math.exp %126 : vector<8x16xf32>
    %cst_54 = arith.constant dense<0.000000e+00> : vector<8xf32>
    %128 = vector.multi_reduction <add>, %127, %cst_54 [1] : vector<8x16xf32> to vector<8xf32>
    %129 = vector.shape_cast %128 : vector<8xf32> to vector<8x1xf32>
    %130 = arith.truncf %127 : vector<8x16xf32> to vector<8x16xbf16>
    %cst_55 = arith.constant dense<0.000000e+00> : vector<8x16xf32>
    %131 = tpu.matmul %130, %121, %cst_55 {dimension_numbers = #tpu.dot_dimension_numbers<[1], [0], [0], [1], [0, 0, 1, 1], [], []>} : vector<8x16xbf16>, vector<16x16xbf16>, vector<8x16xf32> -> vector<8x16xf32>
    %132 = vector.broadcast %129 : vector<8x1xf32> to vector<8x16xf32>
    %133 = arith.divf %131, %132 : vector<8x16xf32>
    %c8_56 = arith.constant 8 : index
    %c16_57 = arith.constant 16 : index
    %134 = vector.load %arg15[%c8_56, %c16_57] : memref<16x64xf32, #tpu.memory_space<vmem>>, vector<8x16xf32>
    tpu.vector_store %arg15[%c8_56, %c16_57], %133 {strides = array<i32>} : memref<16x64xf32, #tpu.memory_space<vmem>>, vector<8x16xf32>,
    %135 = vector.extract_strided_slice %102 {offsets = [0, 32], sizes = [8, 16], strides = [1, 1]} : vector<8x64xbf16> to vector<8x16xbf16>
    %136 = vector.extract_strided_slice %99 {offsets = [0, 32], sizes = [16, 16], strides = [1, 1]} : vector<16x64xbf16> to vector<16x16xbf16>
    %137 = vector.extract_strided_slice %101 {offsets = [0, 32], sizes = [16, 16], strides = [1, 1]} : vector<16x64xbf16> to vector<16x16xbf16>
    %cst_58 = arith.constant dense<0.000000e+00> : vector<8x16xf32>
    %138 = tpu.matmul %135, %136, %cst_58 {dimension_numbers = #tpu.dot_dimension_numbers<[1], [1], [0], [0], [0, 0, 1, 0], [], []>} : vector<8x16xbf16>, vector<16x16xbf16>, vector<8x16xf32> -> vector<8x16xf32>
    %cst_59 = arith.constant dense<0xFF800000> : vector<8xf32>
    %139 = vector.multi_reduction <maximumf>, %138, %cst_59 [1] : vector<8x16xf32> to vector<8xf32>
    %140 = vector.shape_cast %139 : vector<8xf32> to vector<8x1xf32>
    %141 = vector.broadcast %140 : vector<8x1xf32> to vector<8x16xf32>
    %142 = arith.subf %138, %141 : vector<8x16xf32>
    %143 = math.exp %142 : vector<8x16xf32>
    %cst_60 = arith.constant dense<0.000000e+00> : vector<8xf32>
    %144 = vector.multi_reduction <add>, %143, %cst_60 [1] : vector<8x16xf32> to vector<8xf32>
    %145 = vector.shape_cast %144 : vector<8xf32> to vector<8x1xf32>
    %146 = arith.truncf %143 : vector<8x16xf32> to vector<8x16xbf16>
    %cst_61 = arith.constant dense<0.000000e+00> : vector<8x16xf32>
    %147 = tpu.matmul %146, %137, %cst_61 {dimension_numbers = #tpu.dot_dimension_numbers<[1], [0], [0], [1], [0, 0, 1, 1], [], []>} : vector<8x16xbf16>, vector<16x16xbf16>, vector<8x16xf32> -> vector<8x16xf32>
    %148 = vector.broadcast %145 : vector<8x1xf32> to vector<8x16xf32>
    %149 = arith.divf %147, %148 : vector<8x16xf32>
    %c8_62 = arith.constant 8 : index
    %c32_63 = arith.constant 32 : index
    %150 = vector.load %arg15[%c8_62, %c32_63] : memref<16x64xf32, #tpu.memory_space<vmem>>, vector<8x16xf32>
    tpu.vector_store %arg15[%c8_62, %c32_63], %149 {strides = array<i32>} : memref<16x64xf32, #tpu.memory_space<vmem>>, vector<8x16xf32>,
    %151 = vector.extract_strided_slice %102 {offsets = [0, 48], sizes = [8, 16], strides = [1, 1]} : vector<8x64xbf16> to vector<8x16xbf16>
    %152 = vector.extract_strided_slice %99 {offsets = [0, 48], sizes = [16, 16], strides = [1, 1]} : vector<16x64xbf16> to vector<16x16xbf16>
    %153 = vector.extract_strided_slice %101 {offsets = [0, 48], sizes = [16, 16], strides = [1, 1]} : vector<16x64xbf16> to vector<16x16xbf16>
    %cst_64 = arith.constant dense<0.000000e+00> : vector<8x16xf32>
    %154 = tpu.matmul %151, %152, %cst_64 {dimension_numbers = #tpu.dot_dimension_numbers<[1], [1], [0], [0], [0, 0, 1, 0], [], []>} : vector<8x16xbf16>, vector<16x16xbf16>, vector<8x16xf32> -> vector<8x16xf32>
    %cst_65 = arith.constant dense<0xFF800000> : vector<8xf32>
    %155 = vector.multi_reduction <maximumf>, %154, %cst_65 [1] : vector<8x16xf32> to vector<8xf32>
    %156 = vector.shape_cast %155 : vector<8xf32> to vector<8x1xf32>
    %157 = vector.broadcast %156 : vector<8x1xf32> to vector<8x16xf32>
    %158 = arith.subf %154, %157 : vector<8x16xf32>
    %159 = math.exp %158 : vector<8x16xf32>
    %cst_66 = arith.constant dense<0.000000e+00> : vector<8xf32>
    %160 = vector.multi_reduction <add>, %159, %cst_66 [1] : vector<8x16xf32> to vector<8xf32>
    %161 = vector.shape_cast %160 : vector<8xf32> to vector<8x1xf32>
    %162 = arith.truncf %159 : vector<8x16xf32> to vector<8x16xbf16>
    %cst_67 = arith.constant dense<0.000000e+00> : vector<8x16xf32>
    %163 = tpu.matmul %162, %153, %cst_67 {dimension_numbers = #tpu.dot_dimension_numbers<[1], [0], [0], [1], [0, 0, 1, 1], [], []>} : vector<8x16xbf16>, vector<16x16xbf16>, vector<8x16xf32> -> vector<8x16xf32>
    %164 = vector.broadcast %161 : vector<8x1xf32> to vector<8x16xf32>
    %165 = arith.divf %163, %164 : vector<8x16xf32>
    %c8_68 = arith.constant 8 : index
    %c48_69 = arith.constant 48 : index
    %166 = vector.load %arg15[%c8_68, %c48_69] : memref<16x64xf32, #tpu.memory_space<vmem>>, vector<8x16xf32>
    tpu.vector_store %arg15[%c8_68, %c48_69], %165 {strides = array<i32>} : memref<16x64xf32, #tpu.memory_space<vmem>>, vector<8x16xf32>,
    %c0_70 = arith.constant 0 : index
    %c0_71 = arith.constant 0 : index
    %167 = vector.load %arg15[%c0_70, %c0_71] : memref<16x64xf32, #tpu.memory_space<vmem>>, vector<16x64xf32>
    %168 = arith.truncf %167 : vector<16x64xf32> to vector<16x64xbf16>
    %c0_72 = arith.constant 0 : index
    %c0_73 = arith.constant 0 : index
    %169 = vector.load %arg7[%c0_72, %c0_73] : memref<64x32xbf16, #tpu.memory_space<vmem>>, vector<64x32xbf16>
    %cst_74 = arith.constant dense<0.000000e+00> : vector<16x32xf32>
    %170 = tpu.matmul %168, %169, %cst_74 {dimension_numbers = #tpu.dot_dimension_numbers<[1], [0], [0], [1], [0, 0, 1, 1], [], []>} : vector<16x64xbf16>, vector<64x32xbf16>, vector<16x32xf32> -> vector<16x32xf32>
    %c0_75 = arith.constant 0 : index
    %c0_76 = arith.constant 0 : index
    %171 = vector.load %arg11[%c0_75, %c0_76] : memref<1x32xf32, #tpu.memory_space<vmem>>, vector<1x32xf32>
    %172 = vector.broadcast %171 : vector<1x32xf32> to vector<16x32xf32>
    %173 = arith.addf %170, %172 : vector<16x32xf32>
    %174 = vector.shape_cast %173 : vector<16x32xf32> to vector<2x8x32xf32>
    %c0_77 = arith.constant 0 : index
    %c0_78 = arith.constant 0 : index
    %c0_79 = arith.constant 0 : index
    %175 = vector.load %arg14[%c0_77, %c0_78, %c0_79] : memref<2x8x32xf32, #tpu.memory_space<vmem>>, vector<2x8x32xf32>
    tpu.vector_store %arg14[%c0_77, %c0_78, %c0_79], %174 {strides = array<i32>} : memref<2x8x32xf32, #tpu.memory_space<vmem>>, vector<2x8x32xf32>,
    return
  }
  func.func @transform_0(%arg0: i32) -> (i32, i32, i32) {
    %c0_i32 = arith.constant 0 : i32
    %c0_i32_0 = arith.constant 0 : i32
    %c0_i32_1 = arith.constant 0 : i32
    return %arg0, %c0_i32, %c0_i32_0 : i32, i32, i32
  }
  func.func @transform_1(%arg0: i32) -> (i32, i32, i32) {
    %c0_i32 = arith.constant 0 : i32
    %c0_i32_0 = arith.constant 0 : i32
    %c0_i32_1 = arith.constant 0 : i32
    return %arg0, %c0_i32, %c0_i32_0 : i32, i32, i32
  }
  func.func @transform_2(%arg0: i32) -> (i32, i32, i32) {
    %c0_i32 = arith.constant 0 : i32
    %c0_i32_0 = arith.constant 0 : i32
    %c0_i32_1 = arith.constant 0 : i32
    return %arg0, %c0_i32, %c0_i32_0 : i32, i32, i32
  }
  func.func @transform_3(%arg0: i32) -> (i32, i32) {
    %c0_i32 = arith.constant 0 : i32
    %c0_i32_0 = arith.constant 0 : i32
    %c0_i32_1 = arith.constant 0 : i32
    return %c0_i32, %c0_i32_0 : i32, i32
  }
  func.func @transform_4(%arg0: i32) -> (i32, i32) {
    %c0_i32 = arith.constant 0 : i32
    %c0_i32_0 = arith.constant 0 : i32
    %c0_i32_1 = arith.constant 0 : i32
    return %c0_i32, %c0_i32_0 : i32, i32
  }
  func.func @transform_5(%arg0: i32) -> (i32, i32) {
    %c0_i32 = arith.constant 0 : i32
    %c0_i32_0 = arith.constant 0 : i32
    %c0_i32_1 = arith.constant 0 : i32
    return %c0_i32, %c0_i32_0 : i32, i32
  }
  func.func @transform_6(%arg0: i32) -> (i32, i32) {
    %c0_i32 = arith.constant 0 : i32
    %c0_i32_0 = arith.constant 0 : i32
    %c0_i32_1 = arith.constant 0 : i32
    return %c0_i32, %c0_i32_0 : i32, i32
  }
  func.func @transform_7(%arg0: i32) -> (i32, i32) {
    %c0_i32 = arith.constant 0 : i32
    %c0_i32_0 = arith.constant 0 : i32
    %c0_i32_1 = arith.constant 0 : i32
    return %c0_i32, %c0_i32_0 : i32, i32
  }
  func.func @transform_8(%arg0: i32) -> (i32, i32) {
    %c0_i32 = arith.constant 0 : i32
    %c0_i32_0 = arith.constant 0 : i32
    %c0_i32_1 = arith.constant 0 : i32
    return %c0_i32, %c0_i32_0 : i32, i32
  }
  func.func @transform_9(%arg0: i32) -> (i32, i32) {
    %c0_i32 = arith.constant 0 : i32
    %c0_i32_0 = arith.constant 0 : i32
    %c0_i32_1 = arith.constant 0 : i32
    return %c0_i32, %c0_i32_0 : i32, i32
  }
  func.func @transform_10(%arg0: i32) -> (i32, i32) {
    %c0_i32 = arith.constant 0 : i32
    %c0_i32_0 = arith.constant 0 : i32
    %c0_i32_1 = arith.constant 0 : i32
    return %c0_i32, %c0_i32_0 : i32, i32
  }
  func.func @transform_11(%arg0: i32) -> (i32, i32) {
    %c0_i32 = arith.constant 0 : i32
    %c0_i32_0 = arith.constant 0 : i32
    %c0_i32_1 = arith.constant 0 : i32
    return %c0_i32, %c0_i32_0 : i32, i32
  }
  func.func @transform_12(%arg0: i32) -> (i32, i32) {
    %c0_i32 = arith.constant 0 : i32
    %c0_i32_0 = arith.constant 0 : i32
    %c0_i32_1 = arith.constant 0 : i32
    return %c0_i32, %c0_i32_0 : i32, i32
  }
  func.func @transform_13(%arg0: i32) -> (i32, i32, i32) {
    %c0_i32 = arith.constant 0 : i32
    %c0_i32_0 = arith.constant 0 : i32
    %c0_i32_1 = arith.constant 0 : i32
    return %arg0, %c0_i32, %c0_i32_0 : i32, i32, i32
  }
}

</mosaic_0001>

<llo_original>
// kernel: tpu_custom_call.1
$region0: #{tpu_custom_call.1}
  #allocation0 [shape = 'u32[]', space=smem, size = 0x4, offset = 0x4, fixed_abs, tag = 'smem constant byte address 0x4 - core index']
  #allocation1 [shape = 'u32[144,128]{1,0:T(1,128)}', space=vmem, size = 0x12000, scoped, tag = 'internal scratch']
  #allocation2 [shape = 'f32[16,64]{1,0:T(8,128)}', space=vmem, size = 0x2000, scoped, tag = 'scratch operand']
  %s0 = inlined_call_operand.vmem [shape: f32[2,8,32], index: 0, kind: input, shape index: {}]
  %s1 = inlined_call_operand.vmem [shape: f32[2,8,32], index: 1, kind: input, shape index: {}]
  %s2 = inlined_call_operand.vmem [shape: f32[2,8,32], index: 2, kind: input, shape index: {}]
  %s3 = inlined_call_operand.hbm [shape: bf16[32,64], index: 3, kind: input, shape index: {}]
  %s4 = inlined_call_operand.hbm [shape: bf16[32,64], index: 4, kind: input, shape index: {}]
  %s5 = inlined_call_operand.hbm [shape: bf16[32,64], index: 5, kind: input, shape index: {}]
  %s6 = inlined_call_operand.vmem [shape: bf16[64,32], index: 6, kind: input, shape index: {}]
  %s7 = inlined_call_operand.vmem [shape: f32[1,64], index: 7, kind: input, shape index: {}]
  %s8 = inlined_call_operand.vmem [shape: f32[1,64], index: 8, kind: input, shape index: {}]
  %s9 = inlined_call_operand.vmem [shape: f32[1,64], index: 9, kind: input, shape index: {}]
  %s10 = inlined_call_operand.vmem [shape: f32[1,32], index: 10, kind: input, shape index: {}]
  %s11 = inlined_call_operand.vmem [shape: bf16[8,64], index: 11, kind: input, shape index: {}]
  %s12 = inlined_call_operand.vmem [shape: bf16[8,64], index: 12, kind: input, shape index: {}]
  %s13 = inlined_call_operand.hbm [shape: f32[2,8,32], index: 13, kind: output, shape index: {}]
  %s14 = sld [smem:[#allocation0]]
  $region74: #{tpu_custom_call.1} parent=0
    _
  %s16 = ssub.s32 1, %s14
  %s17 = scalar_select 0, %s16, %s14
  $region1: #{tpu_custom_call.1} parent=0
    #allocation3 [shape = 'u8[8192]{0}', space=vmem, size = 0x2000, scoped, tag = 'input window, operand 3, single buffered']
    #allocation4 [shape = 's32[1]{0}', space=sflag, size = 0x4, scoped, tag = 'scoped memory for tpu_custom_call.1']
    #allocation5 [shape = 's32[1]{0}', space=sflag, size = 0x4, scoped, tag = 'scoped memory for tpu_custom_call.1']
    #allocation6 [shape = 'u8[8192]{0}', space=vmem, size = 0x2000, scoped, tag = 'input window, operand 4, single buffered']
    #allocation7 [shape = 's32[1]{0}', space=sflag, size = 0x4, scoped, tag = 'scoped memory for tpu_custom_call.1']
    #allocation8 [shape = 'u8[8192]{0}', space=vmem, size = 0x2000, scoped, tag = 'input window, operand 5, single buffered']
    #allocation9 [shape = 'u8[8192]{0}', space=vmem, size = 0x2000, scoped, tag = 'output window, operand 0, single buffered']
    %18 = vsyncpa [#allocation4], 0
    %19 = vsyncpa [#allocation7], 0
    %20 = vsyncpa [#allocation5], 0
    // Predicated region
    $region2: #{tpu_custom_call.1} parent=1 // pred_check
      _
    $region3: #{tpu_custom_call.1} parent=1 // pred_check_branch
      %22 = sbr.rel (0) target = $region5
    $region4: #{tpu_custom_call.1} parent=1 // pred_region
      _
    $region5: #{tpu_custom_call.1} parent=1 // pred_fallthru
      _
    // Predicated region
    $region6: #{tpu_custom_call.1} parent=1 // pred_check
      _
    $region7: #{tpu_custom_call.1} parent=1 // pred_check_branch
      %24 = sbr.rel (0) target = $region9
    $region8: #{tpu_custom_call.1} parent=1 // pred_region
      _
    $region9: #{tpu_custom_call.1} parent=1 // pred_fallthru
      _
    // Predicated region
    $region10: #{tpu_custom_call.1} parent=1 // pred_check
      _
    $region11: #{tpu_custom_call.1} parent=1 // pred_check_branch
      %26 = sbr.rel (0) target = $region13
    $region12: #{tpu_custom_call.1} parent=1 // pred_region
      _
    $region13: #{tpu_custom_call.1} parent=1 // pred_fallthru
      _
    // Predicated region
    $region14: #{tpu_custom_call.1} parent=1 // pred_check
      _
    $region15: #{tpu_custom_call.1} parent=1 // pred_check_branch
      %28 = sbr.rel (0) target = $region17
    $region16: #{tpu_custom_call.1} parent=1 // pred_region
      %s30 = ssub.s32 256, 256
      %31 = vsyncadd [#allocation4], %s30
      %s32 = sshll.u32 [#allocation3], 4
      %s33 = int_to_ptr.vmem [resolvable:$true] %s32
      %38 = dma.hbm_to_vmem [thread:$0]  %s3, 256, %s33, [#allocation4], 64, 64, 4
    $region17: #{tpu_custom_call.1} parent=1 // pred_fallthru
      _
    // Predicated region
    $region18: #{tpu_custom_call.1} parent=1 // pred_check
      _
    $region19: #{tpu_custom_call.1} parent=1 // pred_check_branch
      %40 = sbr.rel (0) target = $region21
    $region20: #{tpu_custom_call.1} parent=1 // pred_region
      %s42 = ssub.s32 256, 256
      %43 = vsyncadd [#allocation7], %s42
      %s44 = sshll.u32 [#allocation6], 4
      %s45 = int_to_ptr.vmem [resolvable:$true] %s44
      %50 = dma.hbm_to_vmem [thread:$0]  %s4, 256, %s45, [#allocation7], 64, 64, 4
    $region21: #{tpu_custom_call.1} parent=1 // pred_fallthru
      _
    // Predicated region
    $region22: #{tpu_custom_call.1} parent=1 // pred_check
      _
    $region23: #{tpu_custom_call.1} parent=1 // pred_check_branch
      %52 = sbr.rel (0) target = $region25
    $region24: #{tpu_custom_call.1} parent=1 // pred_region
      %s54 = ssub.s32 256, 256
      %55 = vsyncadd [#allocation7], %s54
      %s56 = sshll.u32 [#allocation8], 4
      %s57 = int_to_ptr.vmem [resolvable:$true] %s56
      %62 = dma.hbm_to_vmem [thread:$0]  %s5, 256, %s57, [#allocation7], 64, 64, 4
    $region25: #{tpu_custom_call.1} parent=1 // pred_fallthru
      _
    // Predicated region
    $region26: #{tpu_custom_call.1} parent=1 // pred_check
      _
    $region27: #{tpu_custom_call.1} parent=1 // pred_check_branch
      %64 = sbr.rel (0) target = $region29
    $region28: #{tpu_custom_call.1} parent=1 // pred_region
      _
    $region29: #{tpu_custom_call.1} parent=1 // pred_fallthru
      _
    // Predicated region
    $region30: #{tpu_custom_call.1} parent=1 // pred_check
      _
    $region31: #{tpu_custom_call.1} parent=1 // pred_check_branch
      %66 = sbr.rel (0) target = $region33
    $region32: #{tpu_custom_call.1} parent=1 // pred_region
      _
    $region33: #{tpu_custom_call.1} parent=1 // pred_fallthru
      _
    // Predicated region
    $region34: #{tpu_custom_call.1} parent=1 // pred_check
      _
    $region35: #{tpu_custom_call.1} parent=1 // pred_check_branch
      %68 = sbr.rel (0) target = $region37
    $region36: #{tpu_custom_call.1} parent=1 // pred_region
      _
    $region37: #{tpu_custom_call.1} parent=1 // pred_fallthru
      _
    // Predicated region
    $region38: #{tpu_custom_call.1} parent=1 // pred_check
      _
    $region39: #{tpu_custom_call.1} parent=1 // pred_check_branch
      %70 = sbr.rel (0) target = $region41
    $region40: #{tpu_custom_call.1} parent=1 // pred_region
      _
    $region41: #{tpu_custom_call.1} parent=1 // pred_fallthru
      _
    // Predicated region
    $region42: #{tpu_custom_call.1} parent=1 // pred_check
      _
    $region43: #{tpu_custom_call.1} parent=1 // pred_check_branch
      %72 = sbr.rel (0) target = $region45
    $region44: #{tpu_custom_call.1} parent=1 // pred_region
      _
    $region45: #{tpu_custom_call.1} parent=1 // pred_fallthru
      _
    // Predicated region
    $region46: #{tpu_custom_call.1} parent=1 // pred_check
      _
    $region47: #{tpu_custom_call.1} parent=1 // pred_check_branch
      %74 = sbr.rel (0) target = $region49
    $region48: #{tpu_custom_call.1} parent=1 // pred_region
      _
    $region49: #{tpu_custom_call.1} parent=1 // pred_fallthru
      _
    // Predicated region
    $region50: #{tpu_custom_call.1} parent=1 // pred_check
      _
    $region51: #{tpu_custom_call.1} parent=1 // pred_check_branch
      %76 = sbr.rel (0) target = $region53
    $region52: #{tpu_custom_call.1} parent=1 // pred_region
      _
    $region53: #{tpu_custom_call.1} parent=1 // pred_fallthru
      _
    // Predicated region
    $region54: #{tpu_custom_call.1} parent=1 // pred_check
      _
    $region55: #{tpu_custom_call.1} parent=1 // pred_check_branch
      %78 = sbr.rel (0) target = $region57
    $region56: #{tpu_custom_call.1} parent=1 // pred_region
      %79 = dma.done [#allocation4], 256
    $region57: #{tpu_custom_call.1} parent=1 // pred_fallthru
      _
    // Predicated region
    $region58: #{tpu_custom_call.1} parent=1 // pred_check
      _
    $region59: #{tpu_custom_call.1} parent=1 // pred_check_branch
      %81 = sbr.rel (0) target = $region61
    $region60: #{tpu_custom_call.1} parent=1 // pred_region
      %82 = dma.done [#allocation7], 256
    $region61: #{tpu_custom_call.1} parent=1 // pred_fallthru
      _
    // Predicated region
    $region62: #{tpu_custom_call.1} parent=1 // pred_check
      _
    $region63: #{tpu_custom_call.1} parent=1 // pred_check_branch
      %84 = sbr.rel (0) target = $region65
    $region64: #{tpu_custom_call.1} parent=1 // pred_region
      %85 = dma.done [#allocation7], 256
    $region65: #{tpu_custom_call.1} parent=1 // pred_fallthru
      _
    %v87 = vld [vmem:[%s0] sm:$0xff]
    %v88 = vld [vmem:[%s0 + $0x8] sm:$0xff]
    %v89 = vpack.c.bf16 %v88, %v87
    %v90 = vld [vmem:[%s1] sm:$0xff]
    %v91 = vld [vmem:[%s1 + $0x8] sm:$0xff]
    %v92 = vpack.c.bf16 %v91, %v90
    %v93 = vld [vmem:[%s2] sm:$0xff]
    %v94 = vld [vmem:[%s2 + $0x8] sm:$0xff]
    %v95 = vpack.c.bf16 %v94, %v93
    %v96 = vld [vmem:[#allocation3] sm:$0xf]
    %v97 = vld [vmem:[#allocation3 + $0x4] sm:$0xf]
    %v98 = vld [vmem:[#allocation3 + $0x8] sm:$0xf]
    %v99 = vld [vmem:[#allocation3 + $0xc] sm:$0xf]
    %v100 = vld [vmem:[%s7] sm:$0x1]
    %v102 = vlaneseq
    %v103 = vshrl.u32 %v102, 7
    %v104 = vsub.s32 0, %v103
    %v105 = vrot.slane %v100, %v104
    %v111 = vunpack.c.l.b16 %v96
    %v112 = vunpack.c.l.b16 %v97
    %v113 = vunpack.c.l.b16 %v98
    %v114 = vunpack.c.l.b16 %v99
    %v115 = vpack.c.b16 %v112, %v111
    %v116 = vpack.c.b16 %v114, %v113
    %vm119 = vcmask 261120
    %v121 = vsel %vm119, %v89, 0
    %123 = vmatprep.subr.bf16.mxu0 0
    %124 = vmatpush1.bf16.msra.mxu0 %v115
    %125 = vmatprep.subr.bf16.mxu0 0
    %126 = vmatpush1.bf16.msra.mxu0 %v116
    %127 = vmatprep.subr.bf16.mxu0 0
    %128 = vmatpush1.bf16.msra.mxu0 0
    %129 = vmatprep.subr.bf16.mxu0 0
    %130 = vmatpush1.bf16.msra.mxu0 0
    %131 = vmatprep.subr.bf16.mxu0 0
    %132 = vmatpush1.bf16.msra.mxu0 0
    %133 = vmatprep.subr.bf16.mxu0 0
    %134 = vmatpush1.bf16.msra.mxu0 0
    %135 = vmatprep.subr.bf16.mxu0 0
    %136 = vmatpush1.bf16.msra.mxu0 0
    %137 = vmatprep.subr.bf16.mxu0 0
    %138 = vmatpush1.bf16.msra.mxu0 0
    %139 = vmatprep.subr.bf16.mxu0 0
    %140 = vmatpush1.bf16.msra.mxu0 0
    %141 = vmatprep.subr.bf16.mxu0 0
    %142 = vmatpush1.bf16.msra.mxu0 0
    %143 = vmatprep.subr.bf16.mxu0 0
    %144 = vmatpush1.bf16.msra.mxu0 0
    %145 = vmatprep.subr.bf16.mxu0 0
    %146 = vmatpush1.bf16.msra.mxu0 0
    %147 = vmatprep.subr.bf16.mxu0 0
    %148 = vmatpush1.bf16.msra.mxu0 0
    %149 = vmatprep.subr.bf16.mxu0 0
    %150 = vmatpush1.bf16.msra.mxu0 0
    %151 = vmatprep.subr.bf16.mxu0 0
    %152 = vmatpush1.bf16.msra.mxu0 0
    %153 = vmatprep.subr.bf16.mxu0 0
    %154 = vmatpush1.bf16.msra.mxu0 0
    %155 = vmatprep.mubr.bf16.mxu0 0
    %156 = vmatmul.mubr.bf16.gmra.mrb[0].mxu0 %v121
    %v157 = vpop.f32.mrb[0].mxu0
    %v158 = vadd.f32 %v105, %v157
    %v159 = vpop.f32.mrb[0].mxu0
    %v160 = vpop.f32.mrb[0].mxu0
    %v161 = vadd.f32 %v105, %v160
    %v162 = vpop.f32.mrb[0].mxu0
    %163 = vdwg.mxu0
    %v164 = vld [vmem:[#allocation6] sm:$0xf]
    %v165 = vld [vmem:[#allocation6 + $0x4] sm:$0xf]
    %v166 = vld [vmem:[#allocation6 + $0x8] sm:$0xf]
    %v167 = vld [vmem:[#allocation6 + $0xc] sm:$0xf]
    %v168 = vld [vmem:[%s8] sm:$0x1]
    %v170 = vlaneseq
    %v171 = vshrl.u32 %v170, 7
    %v172 = vsub.s32 0, %v171
    %v173 = vrot.slane %v168, %v172
    %v179 = vunpack.c.l.b16 %v164
    %v180 = vunpack.c.l.b16 %v165
    %v181 = vunpack.c.l.b16 %v166
    %v182 = vunpack.c.l.b16 %v167
    %v183 = vpack.c.b16 %v180, %v179
    %v184 = vpack.c.b16 %v182, %v181
    %v188 = vsel %vm119, %v92, 0
    %190 = vmatprep.subr.bf16.mxu0 0
    %191 = vmatpush1.bf16.msra.mxu0 %v183
    %192 = vmatprep.subr.bf16.mxu0 0
    %193 = vmatpush1.bf16.msra.mxu0 %v184
    %194 = vmatprep.subr.bf16.mxu0 0
    %195 = vmatpush1.bf16.msra.mxu0 0
    %196 = vmatprep.subr.bf16.mxu0 0
    %197 = vmatpush1.bf16.msra.mxu0 0
    %198 = vmatprep.subr.bf16.mxu0 0
    %199 = vmatpush1.bf16.msra.mxu0 0
    %200 = vmatprep.subr.bf16.mxu0 0
    %201 = vmatpush1.bf16.msra.mxu0 0
    %202 = vmatprep.subr.bf16.mxu0 0
    %203 = vmatpush1.bf16.msra.mxu0 0
    %204 = vmatprep.subr.bf16.mxu0 0
    %205 = vmatpush1.bf16.msra.mxu0 0
    %206 = vmatprep.subr.bf16.mxu0 0
    %207 = vmatpush1.bf16.msra.mxu0 0
    %208 = vmatprep.subr.bf16.mxu0 0
    %209 = vmatpush1.bf16.msra.mxu0 0
    %210 = vmatprep.subr.bf16.mxu0 0
    %211 = vmatpush1.bf16.msra.mxu0 0
    %212 = vmatprep.subr.bf16.mxu0 0
    %213 = vmatpush1.bf16.msra.mxu0 0
    %214 = vmatprep.subr.bf16.mxu0 0
    %215 = vmatpush1.bf16.msra.mxu0 0
    %216 = vmatprep.subr.bf16.mxu0 0
    %217 = vmatpush1.bf16.msra.mxu0 0
    %218 = vmatprep.subr.bf16.mxu0 0
    %219 = vmatpush1.bf16.msra.mxu0 0
    %220 = vmatprep.subr.bf16.mxu0 0
    %221 = vmatpush1.bf16.msra.mxu0 0
    %222 = vmatprep.mubr.bf16.mxu0 0
    %223 = vmatmul.mubr.bf16.gmra.mrb[0].mxu0 %v188
    %v224 = vpop.f32.mrb[0].mxu0
    %v225 = vadd.f32 %v173, %v224
    %v226 = vpop.f32.mrb[0].mxu0
    %v227 = vpop.f32.mrb[0].mxu0
    %v228 = vadd.f32 %v173, %v227
    %v229 = vpop.f32.mrb[0].mxu0
    %230 = vdwg.mxu0
    %v231 = vld [vmem:[#allocation8] sm:$0xf]
    %v232 = vld [vmem:[#allocation8 + $0x4] sm:$0xf]
    %v233 = vld [vmem:[#allocation8 + $0x8] sm:$0xf]
    %v234 = vld [vmem:[#allocation8 + $0xc] sm:$0xf]
    %v235 = vld [vmem:[%s9] sm:$0x1]
    %v237 = vlaneseq
    %v238 = vshrl.u32 %v237, 7
    %v239 = vsub.s32 0, %v238
    %v240 = vrot.slane %v235, %v239
    %v246 = vunpack.c.l.b16 %v231
    %v247 = vunpack.c.l.b16 %v232
    %v248 = vunpack.c.l.b16 %v233
    %v249 = vunpack.c.l.b16 %v234
    %v250 = vpack.c.b16 %v247, %v246
    %v251 = vpack.c.b16 %v249, %v248
    %v255 = vsel %vm119, %v95, 0
    %257 = vmatprep.subr.bf16.mxu0 0
    %258 = vmatpush1.bf16.msra.mxu0 %v250
    %259 = vmatprep.subr.bf16.mxu0 0
    %260 = vmatpush1.bf16.msra.mxu0 %v251
    %261 = vmatprep.subr.bf16.mxu0 0
    %262 = vmatpush1.bf16.msra.mxu0 0
    %263 = vmatprep.subr.bf16.mxu0 0
    %264 = vmatpush1.bf16.msra.mxu0 0
    %265 = vmatprep.subr.bf16.mxu0 0
    %266 = vmatpush1.bf16.msra.mxu0 0
    %267 = vmatprep.subr.bf16.mxu0 0
    %268 = vmatpush1.bf16.msra.mxu0 0
    %269 = vmatprep.subr.bf16.mxu0 0
    %270 = vmatpush1.bf16.msra.mxu0 0
    %271 = vmatprep.subr.bf16.mxu0 0
    %272 = vmatpush1.bf16.msra.mxu0 0
    %273 = vmatprep.subr.bf16.mxu0 0
    %274 = vmatpush1.bf16.msra.mxu0 0
    %275 = vmatprep.subr.bf16.mxu0 0
    %276 = vmatpush1.bf16.msra.mxu0 0
    %277 = vmatprep.subr.bf16.mxu0 0
    %278 = vmatpush1.bf16.msra.mxu0 0
    %279 = vmatprep.subr.bf16.mxu0 0
    %280 = vmatpush1.bf16.msra.mxu0 0
    %281 = vmatprep.subr.bf16.mxu0 0
    %282 = vmatpush1.bf16.msra.mxu0 0
    %283 = vmatprep.subr.bf16.mxu0 0
    %284 = vmatpush1.bf16.msra.mxu0 0
    %285 = vmatprep.subr.bf16.mxu0 0
    %286 = vmatpush1.bf16.msra.mxu0 0
    %287 = vmatprep.subr.bf16.mxu0 0
    %288 = vmatpush1.bf16.msra.mxu0 0
    %289 = vmatprep.mubr.bf16.mxu0 0
    %290 = vmatmul.mubr.bf16.gmra.mrb[0].mxu0 %v255
    %v291 = vpop.f32.mrb[0].mxu0
    %v292 = vadd.f32 %v240, %v291
    %v293 = vpop.f32.mrb[0].mxu0
    %v294 = vpop.f32.mrb[0].mxu0
    %v295 = vadd.f32 %v240, %v294
    %v296 = vpop.f32.mrb[0].mxu0
    %297 = vdwg.mxu0
    %v298 = vpack.c.bf16 %v161, %v158
    %v299 = vpack.c.bf16 %v228, %v225
    %v300 = vpack.c.bf16 %v295, %v292
    %v301 = vld [vmem:[%s11] sm:$0xf]
    %v302 = vld [vmem:[%s12] sm:$0xf]
    %v304 = vunpack.c.l.b16 %v301
    %v305 = vpack.c.b16 %v304, %v304
    %vm306 = vcmask 1043456
    %v309 = vsel %vm306, %v299, %v305
    %v311 = vunpack.c.l.b16 %v302
    %v312 = vpack.c.b16 %v311, %v311
    %v315 = vsel %vm306, %v300, %v312
    %vm317 = vcmask 130048
    %v319 = vsel %vm317, %v298, 0
    %v321 = vsel %vm317, %v309, 0
    %323 = vmatprep.subr.bf16.mxu0 0
    %324 = vmatpush1.bf16.xpose.msra.mxu0 %v321
    %325 = vmatprep.subr.bf16.mxu0 0
    %326 = vmatpush1.bf16.xpose.msra.mxu0 0
    %327 = vmatprep.subr.bf16.mxu0 0
    %328 = vmatpush1.bf16.xpose.msra.mxu0 0
    %329 = vmatprep.subr.bf16.mxu0 0
    %330 = vmatpush1.bf16.xpose.msra.mxu0 0
    %331 = vmatprep.subr.bf16.mxu0 0
    %332 = vmatpush1.bf16.xpose.msra.mxu0 0
    %333 = vmatprep.subr.bf16.mxu0 0
    %334 = vmatpush1.bf16.xpose.msra.mxu0 0
    %335 = vmatprep.subr.bf16.mxu0 0
    %336 = vmatpush1.bf16.xpose.msra.mxu0 0
    %337 = vmatprep.subr.bf16.mxu0 0
    %338 = vmatpush1.bf16.xpose.msra.mxu0 0
    %339 = vmatprep.subr.bf16.mxu0 0
    %340 = vmatpush1.bf16.xpose.msra.mxu0 0
    %341 = vmatprep.subr.bf16.mxu0 0
    %342 = vmatpush1.bf16.xpose.msra.mxu0 0
    %343 = vmatprep.subr.bf16.mxu0 0
    %344 = vmatpush1.bf16.xpose.msra.mxu0 0
    %345 = vmatprep.subr.bf16.mxu0 0
    %346 = vmatpush1.bf16.xpose.msra.mxu0 0
    %347 = vmatprep.subr.bf16.mxu0 0
    %348 = vmatpush1.bf16.xpose.msra.mxu0 0
    %349 = vmatprep.subr.bf16.mxu0 0
    %350 = vmatpush1.bf16.xpose.msra.mxu0 0
    %351 = vmatprep.subr.bf16.mxu0 0
    %352 = vmatpush1.bf16.xpose.msra.mxu0 0
    %353 = vmatprep.subr.bf16.mxu0 0
    %354 = vmatpush1.bf16.xpose.msra.mxu0 0
    %355 = vmatprep.mubr.bf16.mxu0 0
    %356 = vmatmul.mubr.bf16.gmra.mrb[0].mxu0 %v319
    %v357 = vpop.f32.mrb[0].mxu0
    %v358 = vadd.f32 0.0, %v357
    %v359 = vpop.f32.mrb[0].mxu0
    %v360 = vpop.f32.mrb[0].mxu0
    %v361 = vpop.f32.mrb[0].mxu0
    %362 = vdwg.mxu0
    %v363 = vsel %vm317, %v358, -inf
    %364 = vmax.xlane.f32.xlu0 %v363
    %v365 = vpop.xlane.xlu0 %364
    %v366 = vsub.f32 %v358, %v365
    %v367 = vmul.f32 %v366, 1.442695
    %v368 = vpow.pop %v367
    %v369 = vsel %vm317, %v368, 0.0
    %370 = vadd.xlane.f32.xlu0 %v369
    %v371 = vpop.xlane.xlu0 %370
    %v372 = vpack.c.bf16 %v368, %v368
    %v374 = vsel %vm317, %v372, 0
    %376 = vmatprep.subr.bf16.mxu0 0
    %377 = vmatpush1.bf16.msra.mxu0 %v315
    %378 = vmatprep.subr.bf16.mxu0 0
    %379 = vmatpush1.bf16.msra.mxu0 0
    %380 = vmatprep.subr.bf16.mxu0 0
    %381 = vmatpush1.bf16.msra.mxu0 0
    %382 = vmatprep.subr.bf16.mxu0 0
    %383 = vmatpush1.bf16.msra.mxu0 0
    %384 = vmatprep.subr.bf16.mxu0 0
    %385 = vmatpush1.bf16.msra.mxu0 0
    %386 = vmatprep.subr.bf16.mxu0 0
    %387 = vmatpush1.bf16.msra.mxu0 0
    %388 = vmatprep.subr.bf16.mxu0 0
    %389 = vmatpush1.bf16.msra.mxu0 0
    %390 = vmatprep.subr.bf16.mxu0 0
    %391 = vmatpush1.bf16.msra.mxu0 0
    %392 = vmatprep.subr.bf16.mxu0 0
    %393 = vmatpush1.bf16.msra.mxu0 0
    %394 = vmatprep.subr.bf16.mxu0 0
    %395 = vmatpush1.bf16.msra.mxu0 0
    %396 = vmatprep.subr.bf16.mxu0 0
    %397 = vmatpush1.bf16.msra.mxu0 0
    %398 = vmatprep.subr.bf16.mxu0 0
    %399 = vmatpush1.bf16.msra.mxu0 0
    %400 = vmatprep.subr.bf16.mxu0 0
    %401 = vmatpush1.bf16.msra.mxu0 0
    %402 = vmatprep.subr.bf16.mxu0 0
    %403 = vmatpush1.bf16.msra.mxu0 0
    %404 = vmatprep.subr.bf16.mxu0 0
    %405 = vmatpush1.bf16.msra.mxu0 0
    %406 = vmatprep.subr.bf16.mxu0 0
    %407 = vmatpush1.bf16.msra.mxu0 0
    %408 = vmatprep.mubr.bf16.mxu0 0
    %409 = vmatmul.mubr.bf16.gmra.mrb[0].mxu0 %v374
    %v410 = vpop.f32.mrb[0].mxu0
    %v411 = vadd.f32 0.0, %v410
    %v412 = vpop.f32.mrb[0].mxu0
    %v413 = vpop.f32.mrb[0].mxu0
    %v414 = vpop.f32.mrb[0].mxu0
    %415 = vdwg.mxu0
    %v416 = vrcp.pop %v371
    %v417 = vmul.f32 %v411, %v416
    %418 = vst.msk [vmem:[#allocation2] sm:$0xff] %vm317, %v417
    %420 = vrot.lane.b32.xlu0 %v298, 112
    %v421 = vpop.permute.xlu0 %420
    %423 = vrot.lane.b32.xlu0 %v309, 112
    %v424 = vpop.permute.xlu0 %423
    %v426 = vsel %vm317, %v421, 0
    %v429 = vsel %vm317, %v424, 0
    %431 = vmatprep.subr.bf16.mxu0 0
    %432 = vmatpush1.bf16.xpose.msra.mxu0 %v429
    %433 = vmatprep.subr.bf16.mxu0 0
    %434 = vmatpush1.bf16.xpose.msra.mxu0 0
    %435 = vmatprep.subr.bf16.mxu0 0
    %436 = vmatpush1.bf16.xpose.msra.mxu0 0
    %437 = vmatprep.subr.bf16.mxu0 0
    %438 = vmatpush1.bf16.xpose.msra.mxu0 0
    %439 = vmatprep.subr.bf16.mxu0 0
    %440 = vmatpush1.bf16.xpose.msra.mxu0 0
    %441 = vmatprep.subr.bf16.mxu0 0
    %442 = vmatpush1.bf16.xpose.msra.mxu0 0
    %443 = vmatprep.subr.bf16.mxu0 0
    %444 = vmatpush1.bf16.xpose.msra.mxu0 0
    %445 = vmatprep.subr.bf16.mxu0 0
    %446 = vmatpush1.bf16.xpose.msra.mxu0 0
    %447 = vmatprep.subr.bf16.mxu0 0
    %448 = vmatpush1.bf16.xpose.msra.mxu0 0
    %449 = vmatprep.subr.bf16.mxu0 0
    %450 = vmatpush1.bf16.xpose.msra.mxu0 0
    %451 = vmatprep.subr.bf16.mxu0 0
    %452 = vmatpush1.bf16.xpose.msra.mxu0 0
    %453 = vmatprep.subr.bf16.mxu0 0
    %454 = vmatpush1.bf16.xpose.msra.mxu0 0
    %455 = vmatprep.subr.bf16.mxu0 0
    %456 = vmatpush1.bf16.xpose.msra.mxu0 0
    %457 = vmatprep.subr.bf16.mxu0 0
    %458 = vmatpush1.bf16.xpose.msra.mxu0 0
    %459 = vmatprep.subr.bf16.mxu0 0
    %460 = vmatpush1.bf16.xpose.msra.mxu0 0
    %461 = vmatprep.subr.bf16.mxu0 0
    %462 = vmatpush1.bf16.xpose.msra.mxu0 0
    %463 = vmatprep.mubr.bf16.mxu0 0
    %464 = vmatmul.mubr.bf16.gmra.mrb[0].mxu0 %v426
    %v465 = vpop.f32.mrb[0].mxu0
    %v466 = vadd.f32 0.0, %v465
    %v467 = vpop.f32.mrb[0].mxu0
    %v468 = vpop.f32.mrb[0].mxu0
    %v469 = vpop.f32.mrb[0].mxu0
    %470 = vdwg.mxu0
    %v471 = vsel %vm317, %v466, -inf
    %472 = vmax.xlane.f32.xlu0 %v471
    %v473 = vpop.xlane.xlu0 %472
    %v474 = vsub.f32 %v466, %v473
    %v475 = vmul.f32 %v474, 1.442695
    %v476 = vpow.pop %v475
    %v477 = vsel %vm317, %v476, 0.0
    %478 = vadd.xlane.f32.xlu0 %v477
    %v479 = vpop.xlane.xlu0 %478
    %v480 = vpack.c.bf16 %v476, %v476
    %482 = vrot.lane.b32.xlu0 %v315, 112
    %v483 = vpop.permute.xlu0 %482
    %v486 = vsel %vm317, %v480, 0
    %488 = vmatprep.subr.bf16.mxu0 0
    %489 = vmatpush1.bf16.msra.mxu0 %v483
    %490 = vmatprep.subr.bf16.mxu0 0
    %491 = vmatpush1.bf16.msra.mxu0 0
    %492 = vmatprep.subr.bf16.mxu0 0
    %493 = vmatpush1.bf16.msra.mxu0 0
    %494 = vmatprep.subr.bf16.mxu0 0
    %495 = vmatpush1.bf16.msra.mxu0 0
    %496 = vmatprep.subr.bf16.mxu0 0
    %497 = vmatpush1.bf16.msra.mxu0 0
    %498 = vmatprep.subr.bf16.mxu0 0
    %499 = vmatpush1.bf16.msra.mxu0 0
    %500 = vmatprep.subr.bf16.mxu0 0
    %501 = vmatpush1.bf16.msra.mxu0 0
    %502 = vmatprep.subr.bf16.mxu0 0
    %503 = vmatpush1.bf16.msra.mxu0 0
    %504 = vmatprep.subr.bf16.mxu0 0
    %505 = vmatpush1.bf16.msra.mxu0 0
    %506 = vmatprep.subr.bf16.mxu0 0
    %507 = vmatpush1.bf16.msra.mxu0 0
    %508 = vmatprep.subr.bf16.mxu0 0
    %509 = vmatpush1.bf16.msra.mxu0 0
    %510 = vmatprep.subr.bf16.mxu0 0
    %511 = vmatpush1.bf16.msra.mxu0 0
    %512 = vmatprep.subr.bf16.mxu0 0
    %513 = vmatpush1.bf16.msra.mxu0 0
    %514 = vmatprep.subr.bf16.mxu0 0
    %515 = vmatpush1.bf16.msra.mxu0 0
    %516 = vmatprep.subr.bf16.mxu0 0
    %517 = vmatpush1.bf16.msra.mxu0 0
    %518 = vmatprep.subr.bf16.mxu0 0
    %519 = vmatpush1.bf16.msra.mxu0 0
    %520 = vmatprep.mubr.bf16.mxu0 0
    %521 = vmatmul.mubr.bf16.gmra.mrb[0].mxu0 %v486
    %v522 = vpop.f32.mrb[0].mxu0
    %v523 = vadd.f32 0.0, %v522
    %v524 = vpop.f32.mrb[0].mxu0
    %v525 = vpop.f32.mrb[0].mxu0
    %v526 = vpop.f32.mrb[0].mxu0
    %527 = vdwg.mxu0
    %v528 = vrcp.pop %v479
    %v529 = vmul.f32 %v523, %v528
    %531 = vrot.lane.b32.xlu0 %v529, 16
    %v532 = vpop.permute.xlu0 %531
    %vm534 = vcmask 261248
    %535 = vst.msk [vmem:[#allocation2] sm:$0xff] %vm534, %v532
    %536 = vrot.lane.b32.xlu0 %v298, 96
    %v537 = vpop.permute.xlu0 %536
    %538 = vrot.lane.b32.xlu0 %v309, 96
    %v539 = vpop.permute.xlu0 %538
    %v541 = vsel %vm317, %v537, 0
    %v544 = vsel %vm317, %v539, 0
    %546 = vmatprep.subr.bf16.mxu0 0
    %547 = vmatpush1.bf16.xpose.msra.mxu0 %v544
    %548 = vmatprep.subr.bf16.mxu0 0
    %549 = vmatpush1.bf16.xpose.msra.mxu0 0
    %550 = vmatprep.subr.bf16.mxu0 0
    %551 = vmatpush1.bf16.xpose.msra.mxu0 0
    %552 = vmatprep.subr.bf16.mxu0 0
    %553 = vmatpush1.bf16.xpose.msra.mxu0 0
    %554 = vmatprep.subr.bf16.mxu0 0
    %555 = vmatpush1.bf16.xpose.msra.mxu0 0
    %556 = vmatprep.subr.bf16.mxu0 0
    %557 = vmatpush1.bf16.xpose.msra.mxu0 0
    %558 = vmatprep.subr.bf16.mxu0 0
    %559 = vmatpush1.bf16.xpose.msra.mxu0 0
    %560 = vmatprep.subr.bf16.mxu0 0
    %561 = vmatpush1.bf16.xpose.msra.mxu0 0
    %562 = vmatprep.subr.bf16.mxu0 0
    %563 = vmatpush1.bf16.xpose.msra.mxu0 0
    %564 = vmatprep.subr.bf16.mxu0 0
    %565 = vmatpush1.bf16.xpose.msra.mxu0 0
    %566 = vmatprep.subr.bf16.mxu0 0
    %567 = vmatpush1.bf16.xpose.msra.mxu0 0
    %568 = vmatprep.subr.bf16.mxu0 0
    %569 = vmatpush1.bf16.xpose.msra.mxu0 0
    %570 = vmatprep.subr.bf16.mxu0 0
    %571 = vmatpush1.bf16.xpose.msra.mxu0 0
    %572 = vmatprep.subr.bf16.mxu0 0
    %573 = vmatpush1.bf16.xpose.msra.mxu0 0
    %574 = vmatprep.subr.bf16.mxu0 0
    %575 = vmatpush1.bf16.xpose.msra.mxu0 0
    %576 = vmatprep.subr.bf16.mxu0 0
    %577 = vmatpush1.bf16.xpose.msra.mxu0 0
    %578 = vmatprep.mubr.bf16.mxu0 0
    %579 = vmatmul.mubr.bf16.gmra.mrb[0].mxu0 %v541
    %v580 = vpop.f32.mrb[0].mxu0
    %v581 = vadd.f32 0.0, %v580
    %v582 = vpop.f32.mrb[0].mxu0
    %v583 = vpop.f32.mrb[0].mxu0
    %v584 = vpop.f32.mrb[0].mxu0
    %585 = vdwg.mxu0
    %v586 = vsel %vm317, %v581, -inf
    %587 = vmax.xlane.f32.xlu0 %v586
    %v588 = vpop.xlane.xlu0 %587
    %v589 = vsub.f32 %v581, %v588
    %v590 = vmul.f32 %v589, 1.442695
    %v591 = vpow.pop %v590
    %v592 = vsel %vm317, %v591, 0.0
    %593 = vadd.xlane.f32.xlu0 %v592
    %v594 = vpop.xlane.xlu0 %593
    %v595 = vpack.c.bf16 %v591, %v591
    %596 = vrot.lane.b32.xlu0 %v315, 96
    %v597 = vpop.permute.xlu0 %596
    %v600 = vsel %vm317, %v595, 0
    %602 = vmatprep.subr.bf16.mxu0 0
    %603 = vmatpush1.bf16.msra.mxu0 %v597
    %604 = vmatprep.subr.bf16.mxu0 0
    %605 = vmatpush1.bf16.msra.mxu0 0
    %606 = vmatprep.subr.bf16.mxu0 0
    %607 = vmatpush1.bf16.msra.mxu0 0
    %608 = vmatprep.subr.bf16.mxu0 0
    %609 = vmatpush1.bf16.msra.mxu0 0
    %610 = vmatprep.subr.bf16.mxu0 0
    %611 = vmatpush1.bf16.msra.mxu0 0
    %612 = vmatprep.subr.bf16.mxu0 0
    %613 = vmatpush1.bf16.msra.mxu0 0
    %614 = vmatprep.subr.bf16.mxu0 0
    %615 = vmatpush1.bf16.msra.mxu0 0
    %616 = vmatprep.subr.bf16.mxu0 0
    %617 = vmatpush1.bf16.msra.mxu0 0
    %618 = vmatprep.subr.bf16.mxu0 0
    %619 = vmatpush1.bf16.msra.mxu0 0
    %620 = vmatprep.subr.bf16.mxu0 0
    %621 = vmatpush1.bf16.msra.mxu0 0
    %622 = vmatprep.subr.bf16.mxu0 0
    %623 = vmatpush1.bf16.msra.mxu0 0
    %624 = vmatprep.subr.bf16.mxu0 0
    %625 = vmatpush1.bf16.msra.mxu0 0
    %626 = vmatprep.subr.bf16.mxu0 0
    %627 = vmatpush1.bf16.msra.mxu0 0
    %628 = vmatprep.subr.bf16.mxu0 0
    %629 = vmatpush1.bf16.msra.mxu0 0
    %630 = vmatprep.subr.bf16.mxu0 0
    %631 = vmatpush1.bf16.msra.mxu0 0
    %632 = vmatprep.subr.bf16.mxu0 0
    %633 = vmatpush1.bf16.msra.mxu0 0
    %634 = vmatprep.mubr.bf16.mxu0 0
    %635 = vmatmul.mubr.bf16.gmra.mrb[0].mxu0 %v600
    %v636 = vpop.f32.mrb[0].mxu0
    %v637 = vadd.f32 0.0, %v636
    %v638 = vpop.f32.mrb[0].mxu0
    %v639 = vpop.f32.mrb[0].mxu0
    %v640 = vpop.f32.mrb[0].mxu0
    %641 = vdwg.mxu0
    %v642 = vrcp.pop %v594
    %v643 = vmul.f32 %v637, %v642
    %645 = vrot.lane.b32.xlu0 %v643, 32
    %v646 = vpop.permute.xlu0 %645
    %vm648 = vcmask 392448
    %649 = vst.msk [vmem:[#allocation2] sm:$0xff] %vm648, %v646
    %650 = vrot.lane.b32.xlu0 %v298, 80
    %v651 = vpop.permute.xlu0 %650
    %652 = vrot.lane.b32.xlu0 %v309, 80
    %v653 = vpop.permute.xlu0 %652
    %v655 = vsel %vm317, %v651, 0
    %v658 = vsel %vm317, %v653, 0
    %660 = vmatprep.subr.bf16.mxu0 0
    %661 = vmatpush1.bf16.xpose.msra.mxu0 %v658
    %662 = vmatprep.subr.bf16.mxu0 0
    %663 = vmatpush1.bf16.xpose.msra.mxu0 0
    %664 = vmatprep.subr.bf16.mxu0 0
    %665 = vmatpush1.bf16.xpose.msra.mxu0 0
    %666 = vmatprep.subr.bf16.mxu0 0
    %667 = vmatpush1.bf16.xpose.msra.mxu0 0
    %668 = vmatprep.subr.bf16.mxu0 0
    %669 = vmatpush1.bf16.xpose.msra.mxu0 0
    %670 = vmatprep.subr.bf16.mxu0 0
    %671 = vmatpush1.bf16.xpose.msra.mxu0 0
    %672 = vmatprep.subr.bf16.mxu0 0
    %673 = vmatpush1.bf16.xpose.msra.mxu0 0
    %674 = vmatprep.subr.bf16.mxu0 0
    %675 = vmatpush1.bf16.xpose.msra.mxu0 0
    %676 = vmatprep.subr.bf16.mxu0 0
    %677 = vmatpush1.bf16.xpose.msra.mxu0 0
    %678 = vmatprep.subr.bf16.mxu0 0
    %679 = vmatpush1.bf16.xpose.msra.mxu0 0
    %680 = vmatprep.subr.bf16.mxu0 0
    %681 = vmatpush1.bf16.xpose.msra.mxu0 0
    %682 = vmatprep.subr.bf16.mxu0 0
    %683 = vmatpush1.bf16.xpose.msra.mxu0 0
    %684 = vmatprep.subr.bf16.mxu0 0
    %685 = vmatpush1.bf16.xpose.msra.mxu0 0
    %686 = vmatprep.subr.bf16.mxu0 0
    %687 = vmatpush1.bf16.xpose.msra.mxu0 0
    %688 = vmatprep.subr.bf16.mxu0 0
    %689 = vmatpush1.bf16.xpose.msra.mxu0 0
    %690 = vmatprep.subr.bf16.mxu0 0
    %691 = vmatpush1.bf16.xpose.msra.mxu0 0
    %692 = vmatprep.mubr.bf16.mxu0 0
    %693 = vmatmul.mubr.bf16.gmra.mrb[0].mxu0 %v655
    %v694 = vpop.f32.mrb[0].mxu0
    %v695 = vadd.f32 0.0, %v694
    %v696 = vpop.f32.mrb[0].mxu0
    %v697 = vpop.f32.mrb[0].mxu0
    %v698 = vpop.f32.mrb[0].mxu0
    %699 = vdwg.mxu0
    %v700 = vsel %vm317, %v695, -inf
    %701 = vmax.xlane.f32.xlu0 %v700
    %v702 = vpop.xlane.xlu0 %701
    %v703 = vsub.f32 %v695, %v702
    %v704 = vmul.f32 %v703, 1.442695
    %v705 = vpow.pop %v704
    %v706 = vsel %vm317, %v705, 0.0
    %707 = vadd.xlane.f32.xlu0 %v706
    %v708 = vpop.xlane.xlu0 %707
    %v709 = vpack.c.bf16 %v705, %v705
    %710 = vrot.lane.b32.xlu0 %v315, 80
    %v711 = vpop.permute.xlu0 %710
    %v714 = vsel %vm317, %v709, 0
    %716 = vmatprep.subr.bf16.mxu0 0
    %717 = vmatpush1.bf16.msra.mxu0 %v711
    %718 = vmatprep.subr.bf16.mxu0 0
    %719 = vmatpush1.bf16.msra.mxu0 0
    %720 = vmatprep.subr.bf16.mxu0 0
    %721 = vmatpush1.bf16.msra.mxu0 0
    %722 = vmatprep.subr.bf16.mxu0 0
    %723 = vmatpush1.bf16.msra.mxu0 0
    %724 = vmatprep.subr.bf16.mxu0 0
    %725 = vmatpush1.bf16.msra.mxu0 0
    %726 = vmatprep.subr.bf16.mxu0 0
    %727 = vmatpush1.bf16.msra.mxu0 0
    %728 = vmatprep.subr.bf16.mxu0 0
    %729 = vmatpush1.bf16.msra.mxu0 0
    %730 = vmatprep.subr.bf16.mxu0 0
    %731 = vmatpush1.bf16.msra.mxu0 0
    %732 = vmatprep.subr.bf16.mxu0 0
    %733 = vmatpush1.bf16.msra.mxu0 0
    %734 = vmatprep.subr.bf16.mxu0 0
    %735 = vmatpush1.bf16.msra.mxu0 0
    %736 = vmatprep.subr.bf16.mxu0 0
    %737 = vmatpush1.bf16.msra.mxu0 0
    %738 = vmatprep.subr.bf16.mxu0 0
    %739 = vmatpush1.bf16.msra.mxu0 0
    %740 = vmatprep.subr.bf16.mxu0 0
    %741 = vmatpush1.bf16.msra.mxu0 0
    %742 = vmatprep.subr.bf16.mxu0 0
    %743 = vmatpush1.bf16.msra.mxu0 0
    %744 = vmatprep.subr.bf16.mxu0 0
    %745 = vmatpush1.bf16.msra.mxu0 0
    %746 = vmatprep.subr.bf16.mxu0 0
    %747 = vmatpush1.bf16.msra.mxu0 0
    %748 = vmatprep.mubr.bf16.mxu0 0
    %749 = vmatmul.mubr.bf16.gmra.mrb[0].mxu0 %v714
    %v750 = vpop.f32.mrb[0].mxu0
    %v751 = vadd.f32 0.0, %v750
    %v752 = vpop.f32.mrb[0].mxu0
    %v753 = vpop.f32.mrb[0].mxu0
    %v754 = vpop.f32.mrb[0].mxu0
    %755 = vdwg.mxu0
    %v756 = vrcp.pop %v708
    %v757 = vmul.f32 %v751, %v756
    %759 = vrot.lane.b32.xlu0 %v757, 48
    %v760 = vpop.permute.xlu0 %759
    %vm762 = vcmask 523648
    %763 = vst.msk [vmem:[#allocation2] sm:$0xff] %vm762, %v760
    %v765 = vrot.slane %v299, 4
    %v767 = vsel %vm306, %v765, %v305
    %v769 = vrot.slane %v300, 4
    %v771 = vsel %vm306, %v769, %v312
    %v773 = vrot.slane %v298, 4
    %v775 = vsel %vm317, %v773, 0
    %v777 = vsel %vm317, %v767, 0
    %779 = vmatprep.subr.bf16.mxu0 0
    %780 = vmatpush1.bf16.xpose.msra.mxu0 %v777
    %781 = vmatprep.subr.bf16.mxu0 0
    %782 = vmatpush1.bf16.xpose.msra.mxu0 0
    %783 = vmatprep.subr.bf16.mxu0 0
    %784 = vmatpush1.bf16.xpose.msra.mxu0 0
    %785 = vmatprep.subr.bf16.mxu0 0
    %786 = vmatpush1.bf16.xpose.msra.mxu0 0
    %787 = vmatprep.subr.bf16.mxu0 0
    %788 = vmatpush1.bf16.xpose.msra.mxu0 0
    %789 = vmatprep.subr.bf16.mxu0 0
    %790 = vmatpush1.bf16.xpose.msra.mxu0 0
    %791 = vmatprep.subr.bf16.mxu0 0
    %792 = vmatpush1.bf16.xpose.msra.mxu0 0
    %793 = vmatprep.subr.bf16.mxu0 0
    %794 = vmatpush1.bf16.xpose.msra.mxu0 0
    %795 = vmatprep.subr.bf16.mxu0 0
    %796 = vmatpush1.bf16.xpose.msra.mxu0 0
    %797 = vmatprep.subr.bf16.mxu0 0
    %798 = vmatpush1.bf16.xpose.msra.mxu0 0
    %799 = vmatprep.subr.bf16.mxu0 0
    %800 = vmatpush1.bf16.xpose.msra.mxu0 0
    %801 = vmatprep.subr.bf16.mxu0 0
    %802 = vmatpush1.bf16.xpose.msra.mxu0 0
    %803 = vmatprep.subr.bf16.mxu0 0
    %804 = vmatpush1.bf16.xpose.msra.mxu0 0
    %805 = vmatprep.subr.bf16.mxu0 0
    %806 = vmatpush1.bf16.xpose.msra.mxu0 0
    %807 = vmatprep.subr.bf16.mxu0 0
    %808 = vmatpush1.bf16.xpose.msra.mxu0 0
    %809 = vmatprep.subr.bf16.mxu0 0
    %810 = vmatpush1.bf16.xpose.msra.mxu0 0
    %811 = vmatprep.mubr.bf16.mxu0 0
    %812 = vmatmul.mubr.bf16.gmra.mrb[0].mxu0 %v775
    %v813 = vpop.f32.mrb[0].mxu0
    %v814 = vadd.f32 0.0, %v813
    %v815 = vpop.f32.mrb[0].mxu0
    %v816 = vpop.f32.mrb[0].mxu0
    %v817 = vpop.f32.mrb[0].mxu0
    %818 = vdwg.mxu0
    %v819 = vsel %vm317, %v814, -inf
    %820 = vmax.xlane.f32.xlu0 %v819
    %v821 = vpop.xlane.xlu0 %820
    %v822 = vsub.f32 %v814, %v821
    %v823 = vmul.f32 %v822, 1.442695
    %v824 = vpow.pop %v823
    %v825 = vsel %vm317, %v824, 0.0
    %826 = vadd.xlane.f32.xlu0 %v825
    %v827 = vpop.xlane.xlu0 %826
    %v828 = vpack.c.bf16 %v824, %v824
    %v830 = vsel %vm317, %v828, 0
    %832 = vmatprep.subr.bf16.mxu0 0
    %833 = vmatpush1.bf16.msra.mxu0 %v771
    %834 = vmatprep.subr.bf16.mxu0 0
    %835 = vmatpush1.bf16.msra.mxu0 0
    %836 = vmatprep.subr.bf16.mxu0 0
    %837 = vmatpush1.bf16.msra.mxu0 0
    %838 = vmatprep.subr.bf16.mxu0 0
    %839 = vmatpush1.bf16.msra.mxu0 0
    %840 = vmatprep.subr.bf16.mxu0 0
    %841 = vmatpush1.bf16.msra.mxu0 0
    %842 = vmatprep.subr.bf16.mxu0 0
    %843 = vmatpush1.bf16.msra.mxu0 0
    %844 = vmatprep.subr.bf16.mxu0 0
    %845 = vmatpush1.bf16.msra.mxu0 0
    %846 = vmatprep.subr.bf16.mxu0 0
    %847 = vmatpush1.bf16.msra.mxu0 0
    %848 = vmatprep.subr.bf16.mxu0 0
    %849 = vmatpush1.bf16.msra.mxu0 0
    %850 = vmatprep.subr.bf16.mxu0 0
    %851 = vmatpush1.bf16.msra.mxu0 0
    %852 = vmatprep.subr.bf16.mxu0 0
    %853 = vmatpush1.bf16.msra.mxu0 0
    %854 = vmatprep.subr.bf16.mxu0 0
    %855 = vmatpush1.bf16.msra.mxu0 0
    %856 = vmatprep.subr.bf16.mxu0 0
    %857 = vmatpush1.bf16.msra.mxu0 0
    %858 = vmatprep.subr.bf16.mxu0 0
    %859 = vmatpush1.bf16.msra.mxu0 0
    %860 = vmatprep.subr.bf16.mxu0 0
    %861 = vmatpush1.bf16.msra.mxu0 0
    %862 = vmatprep.subr.bf16.mxu0 0
    %863 = vmatpush1.bf16.msra.mxu0 0
    %864 = vmatprep.mubr.bf16.mxu0 0
    %865 = vmatmul.mubr.bf16.gmra.mrb[0].mxu0 %v830
    %v866 = vpop.f32.mrb[0].mxu0
    %v867 = vadd.f32 0.0, %v866
    %v868 = vpop.f32.mrb[0].mxu0
    %v869 = vpop.f32.mrb[0].mxu0
    %v870 = vpop.f32.mrb[0].mxu0
    %871 = vdwg.mxu0
    %v872 = vrcp.pop %v827
    %v873 = vmul.f32 %v867, %v872
    %874 = vst.msk [vmem:[#allocation2 + $0x8] sm:$0xff] %vm317, %v873
    %875 = vrot.lane.b32.xlu0 %v773, 112
    %v876 = vpop.permute.xlu0 %875
    %878 = vrot.lane.b32.xlu0 %v767, 112
    %v879 = vpop.permute.xlu0 %878
    %v881 = vsel %vm317, %v876, 0
    %v884 = vsel %vm317, %v879, 0
    %886 = vmatprep.subr.bf16.mxu0 0
    %887 = vmatpush1.bf16.xpose.msra.mxu0 %v884
    %888 = vmatprep.subr.bf16.mxu0 0
    %889 = vmatpush1.bf16.xpose.msra.mxu0 0
    %890 = vmatprep.subr.bf16.mxu0 0
    %891 = vmatpush1.bf16.xpose.msra.mxu0 0
    %892 = vmatprep.subr.bf16.mxu0 0
    %893 = vmatpush1.bf16.xpose.msra.mxu0 0
    %894 = vmatprep.subr.bf16.mxu0 0
    %895 = vmatpush1.bf16.xpose.msra.mxu0 0
    %896 = vmatprep.subr.bf16.mxu0 0
    %897 = vmatpush1.bf16.xpose.msra.mxu0 0
    %898 = vmatprep.subr.bf16.mxu0 0
    %899 = vmatpush1.bf16.xpose.msra.mxu0 0
    %900 = vmatprep.subr.bf16.mxu0 0
    %901 = vmatpush1.bf16.xpose.msra.mxu0 0
    %902 = vmatprep.subr.bf16.mxu0 0
    %903 = vmatpush1.bf16.xpose.msra.mxu0 0
    %904 = vmatprep.subr.bf16.mxu0 0
    %905 = vmatpush1.bf16.xpose.msra.mxu0 0
    %906 = vmatprep.subr.bf16.mxu0 0
    %907 = vmatpush1.bf16.xpose.msra.mxu0 0
    %908 = vmatprep.subr.bf16.mxu0 0
    %909 = vmatpush1.bf16.xpose.msra.mxu0 0
    %910 = vmatprep.subr.bf16.mxu0 0
    %911 = vmatpush1.bf16.xpose.msra.mxu0 0
    %912 = vmatprep.subr.bf16.mxu0 0
    %913 = vmatpush1.bf16.xpose.msra.mxu0 0
    %914 = vmatprep.subr.bf16.mxu0 0
    %915 = vmatpush1.bf16.xpose.msra.mxu0 0
    %916 = vmatprep.subr.bf16.mxu0 0
    %917 = vmatpush1.bf16.xpose.msra.mxu0 0
    %918 = vmatprep.mubr.bf16.mxu0 0
    %919 = vmatmul.mubr.bf16.gmra.mrb[0].mxu0 %v881
    %v920 = vpop.f32.mrb[0].mxu0
    %v921 = vadd.f32 0.0, %v920
    %v922 = vpop.f32.mrb[0].mxu0
    %v923 = vpop.f32.mrb[0].mxu0
    %v924 = vpop.f32.mrb[0].mxu0
    %925 = vdwg.mxu0
    %v926 = vsel %vm317, %v921, -inf
    %927 = vmax.xlane.f32.xlu0 %v926
    %v928 = vpop.xlane.xlu0 %927
    %v929 = vsub.f32 %v921, %v928
    %v930 = vmul.f32 %v929, 1.442695
    %v931 = vpow.pop %v930
    %v932 = vsel %vm317, %v931, 0.0
    %933 = vadd.xlane.f32.xlu0 %v932
    %v934 = vpop.xlane.xlu0 %933
    %v935 = vpack.c.bf16 %v931, %v931
    %937 = vrot.lane.b32.xlu0 %v771, 112
    %v938 = vpop.permute.xlu0 %937
    %v941 = vsel %vm317, %v935, 0
    %943 = vmatprep.subr.bf16.mxu0 0
    %944 = vmatpush1.bf16.msra.mxu0 %v938
    %945 = vmatprep.subr.bf16.mxu0 0
    %946 = vmatpush1.bf16.msra.mxu0 0
    %947 = vmatprep.subr.bf16.mxu0 0
    %948 = vmatpush1.bf16.msra.mxu0 0
    %949 = vmatprep.subr.bf16.mxu0 0
    %950 = vmatpush1.bf16.msra.mxu0 0
    %951 = vmatprep.subr.bf16.mxu0 0
    %952 = vmatpush1.bf16.msra.mxu0 0
    %953 = vmatprep.subr.bf16.mxu0 0
    %954 = vmatpush1.bf16.msra.mxu0 0
    %955 = vmatprep.subr.bf16.mxu0 0
    %956 = vmatpush1.bf16.msra.mxu0 0
    %957 = vmatprep.subr.bf16.mxu0 0
    %958 = vmatpush1.bf16.msra.mxu0 0
    %959 = vmatprep.subr.bf16.mxu0 0
    %960 = vmatpush1.bf16.msra.mxu0 0
    %961 = vmatprep.subr.bf16.mxu0 0
    %962 = vmatpush1.bf16.msra.mxu0 0
    %963 = vmatprep.subr.bf16.mxu0 0
    %964 = vmatpush1.bf16.msra.mxu0 0
    %965 = vmatprep.subr.bf16.mxu0 0
    %966 = vmatpush1.bf16.msra.mxu0 0
    %967 = vmatprep.subr.bf16.mxu0 0
    %968 = vmatpush1.bf16.msra.mxu0 0
    %969 = vmatprep.subr.bf16.mxu0 0
    %970 = vmatpush1.bf16.msra.mxu0 0
    %971 = vmatprep.subr.bf16.mxu0 0
    %972 = vmatpush1.bf16.msra.mxu0 0
    %973 = vmatprep.subr.bf16.mxu0 0
    %974 = vmatpush1.bf16.msra.mxu0 0
    %975 = vmatprep.mubr.bf16.mxu0 0
    %976 = vmatmul.mubr.bf16.gmra.mrb[0].mxu0 %v941
    %v977 = vpop.f32.mrb[0].mxu0
    %v978 = vadd.f32 0.0, %v977
    %v979 = vpop.f32.mrb[0].mxu0
    %v980 = vpop.f32.mrb[0].mxu0
    %v981 = vpop.f32.mrb[0].mxu0
    %982 = vdwg.mxu0
    %v983 = vrcp.pop %v934
    %v984 = vmul.f32 %v978, %v983
    %986 = vrot.lane.b32.xlu0 %v984, 16
    %v987 = vpop.permute.xlu0 %986
    %989 = vst.msk [vmem:[#allocation2 + $0x8] sm:$0xff] %vm534, %v987
    %990 = vrot.lane.b32.xlu0 %v773, 96
    %v991 = vpop.permute.xlu0 %990
    %992 = vrot.lane.b32.xlu0 %v767, 96
    %v993 = vpop.permute.xlu0 %992
    %v995 = vsel %vm317, %v991, 0
    %v998 = vsel %vm317, %v993, 0
    %1000 = vmatprep.subr.bf16.mxu0 0
    %1001 = vmatpush1.bf16.xpose.msra.mxu0 %v998
    %1002 = vmatprep.subr.bf16.mxu0 0
    %1003 = vmatpush1.bf16.xpose.msra.mxu0 0
    %1004 = vmatprep.subr.bf16.mxu0 0
    %1005 = vmatpush1.bf16.xpose.msra.mxu0 0
    %1006 = vmatprep.subr.bf16.mxu0 0
    %1007 = vmatpush1.bf16.xpose.msra.mxu0 0
    %1008 = vmatprep.subr.bf16.mxu0 0
    %1009 = vmatpush1.bf16.xpose.msra.mxu0 0
    %1010 = vmatprep.subr.bf16.mxu0 0
    %1011 = vmatpush1.bf16.xpose.msra.mxu0 0
    %1012 = vmatprep.subr.bf16.mxu0 0
    %1013 = vmatpush1.bf16.xpose.msra.mxu0 0
    %1014 = vmatprep.subr.bf16.mxu0 0
    %1015 = vmatpush1.bf16.xpose.msra.mxu0 0
    %1016 = vmatprep.subr.bf16.mxu0 0
    %1017 = vmatpush1.bf16.xpose.msra.mxu0 0
    %1018 = vmatprep.subr.bf16.mxu0 0
    %1019 = vmatpush1.bf16.xpose.msra.mxu0 0
    %1020 = vmatprep.subr.bf16.mxu0 0
    %1021 = vmatpush1.bf16.xpose.msra.mxu0 0
    %1022 = vmatprep.subr.bf16.mxu0 0
    %1023 = vmatpush1.bf16.xpose.msra.mxu0 0
    %1024 = vmatprep.subr.bf16.mxu0 0
    %1025 = vmatpush1.bf16.xpose.msra.mxu0 0
    %1026 = vmatprep.subr.bf16.mxu0 0
    %1027 = vmatpush1.bf16.xpose.msra.mxu0 0
    %1028 = vmatprep.subr.bf16.mxu0 0
    %1029 = vmatpush1.bf16.xpose.msra.mxu0 0
    %1030 = vmatprep.subr.bf16.mxu0 0
    %1031 = vmatpush1.bf16.xpose.msra.mxu0 0
    %1032 = vmatprep.mubr.bf16.mxu0 0
    %1033 = vmatmul.mubr.bf16.gmra.mrb[0].mxu0 %v995
    %v1034 = vpop.f32.mrb[0].mxu0
    %v1035 = vadd.f32 0.0, %v1034
    %v1036 = vpop.f32.mrb[0].mxu0
    %v1037 = vpop.f32.mrb[0].mxu0
    %v1038 = vpop.f32.mrb[0].mxu0
    %1039 = vdwg.mxu0
    %v1040 = vsel %vm317, %v1035, -inf
    %1041 = vmax.xlane.f32.xlu0 %v1040
    %v1042 = vpop.xlane.xlu0 %1041
    %v1043 = vsub.f32 %v1035, %v1042
    %v1044 = vmul.f32 %v1043, 1.442695
    %v1045 = vpow.pop %v1044
    %v1046 = vsel %vm317, %v1045, 0.0
    %1047 = vadd.xlane.f32.xlu0 %v1046
    %v1048 = vpop.xlane.xlu0 %1047
    %v1049 = vpack.c.bf16 %v1045, %v1045
    %1050 = vrot.lane.b32.xlu0 %v771, 96
    %v1051 = vpop.permute.xlu0 %1050
    %v1054 = vsel %vm317, %v1049, 0
    %1056 = vmatprep.subr.bf16.mxu0 0
    %1057 = vmatpush1.bf16.msra.mxu0 %v1051
    %1058 = vmatprep.subr.bf16.mxu0 0
    %1059 = vmatpush1.bf16.msra.mxu0 0
    %1060 = vmatprep.subr.bf16.mxu0 0
    %1061 = vmatpush1.bf16.msra.mxu0 0
    %1062 = vmatprep.subr.bf16.mxu0 0
    %1063 = vmatpush1.bf16.msra.mxu0 0
    %1064 = vmatprep.subr.bf16.mxu0 0
    %1065 = vmatpush1.bf16.msra.mxu0 0
    %1066 = vmatprep.subr.bf16.mxu0 0
    %1067 = vmatpush1.bf16.msra.mxu0 0
    %1068 = vmatprep.subr.bf16.mxu0 0
    %1069 = vmatpush1.bf16.msra.mxu0 0
    %1070 = vmatprep.subr.bf16.mxu0 0
    %1071 = vmatpush1.bf16.msra.mxu0 0
    %1072 = vmatprep.subr.bf16.mxu0 0
    %1073 = vmatpush1.bf16.msra.mxu0 0
    %1074 = vmatprep.subr.bf16.mxu0 0
    %1075 = vmatpush1.bf16.msra.mxu0 0
    %1076 = vmatprep.subr.bf16.mxu0 0
    %1077 = vmatpush1.bf16.msra.mxu0 0
    %1078 = vmatprep.subr.bf16.mxu0 0
    %1079 = vmatpush1.bf16.msra.mxu0 0
    %1080 = vmatprep.subr.bf16.mxu0 0
    %1081 = vmatpush1.bf16.msra.mxu0 0
    %1082 = vmatprep.subr.bf16.mxu0 0
    %1083 = vmatpush1.bf16.msra.mxu0 0
    %1084 = vmatprep.subr.bf16.mxu0 0
    %1085 = vmatpush1.bf16.msra.mxu0 0
    %1086 = vmatprep.subr.bf16.mxu0 0
    %1087 = vmatpush1.bf16.msra.mxu0 0
    %1088 = vmatprep.mubr.bf16.mxu0 0
    %1089 = vmatmul.mubr.bf16.gmra.mrb[0].mxu0 %v1054
    %v1090 = vpop.f32.mrb[0].mxu0
    %v1091 = vadd.f32 0.0, %v1090
    %v1092 = vpop.f32.mrb[0].mxu0
    %v1093 = vpop.f32.mrb[0].mxu0
    %v1094 = vpop.f32.mrb[0].mxu0
    %1095 = vdwg.mxu0
    %v1096 = vrcp.pop %v1048
    %v1097 = vmul.f32 %v1091, %v1096
    %1099 = vrot.lane.b32.xlu0 %v1097, 32
    %v1100 = vpop.permute.xlu0 %1099
    %1102 = vst.msk [vmem:[#allocation2 + $0x8] sm:$0xff] %vm648, %v1100
    %1103 = vrot.lane.b32.xlu0 %v773, 80
    %v1104 = vpop.permute.xlu0 %1103
    %1105 = vrot.lane.b32.xlu0 %v767, 80
    %v1106 = vpop.permute.xlu0 %1105
    %v1108 = vsel %vm317, %v1104, 0
    %v1111 = vsel %vm317, %v1106, 0
    %1113 = vmatprep.subr.bf16.mxu0 0
    %1114 = vmatpush1.bf16.xpose.msra.mxu0 %v1111
    %1115 = vmatprep.subr.bf16.mxu0 0
    %1116 = vmatpush1.bf16.xpose.msra.mxu0 0
    %1117 = vmatprep.subr.bf16.mxu0 0
    %1118 = vmatpush1.bf16.xpose.msra.mxu0 0
    %1119 = vmatprep.subr.bf16.mxu0 0
    %1120 = vmatpush1.bf16.xpose.msra.mxu0 0
    %1121 = vmatprep.subr.bf16.mxu0 0
    %1122 = vmatpush1.bf16.xpose.msra.mxu0 0
    %1123 = vmatprep.subr.bf16.mxu0 0
    %1124 = vmatpush1.bf16.xpose.msra.mxu0 0
    %1125 = vmatprep.subr.bf16.mxu0 0
    %1126 = vmatpush1.bf16.xpose.msra.mxu0 0
    %1127 = vmatprep.subr.bf16.mxu0 0
    %1128 = vmatpush1.bf16.xpose.msra.mxu0 0
    %1129 = vmatprep.subr.bf16.mxu0 0
    %1130 = vmatpush1.bf16.xpose.msra.mxu0 0
    %1131 = vmatprep.subr.bf16.mxu0 0
    %1132 = vmatpush1.bf16.xpose.msra.mxu0 0
    %1133 = vmatprep.subr.bf16.mxu0 0
    %1134 = vmatpush1.bf16.xpose.msra.mxu0 0
    %1135 = vmatprep.subr.bf16.mxu0 0
    %1136 = vmatpush1.bf16.xpose.msra.mxu0 0
    %1137 = vmatprep.subr.bf16.mxu0 0
    %1138 = vmatpush1.bf16.xpose.msra.mxu0 0
    %1139 = vmatprep.subr.bf16.mxu0 0
    %1140 = vmatpush1.bf16.xpose.msra.mxu0 0
    %1141 = vmatprep.subr.bf16.mxu0 0
    %1142 = vmatpush1.bf16.xpose.msra.mxu0 0
    %1143 = vmatprep.subr.bf16.mxu0 0
    %1144 = vmatpush1.bf16.xpose.msra.mxu0 0
    %1145 = vmatprep.mubr.bf16.mxu0 0
    %1146 = vmatmul.mubr.bf16.gmra.mrb[0].mxu0 %v1108
    %v1147 = vpop.f32.mrb[0].mxu0
    %v1148 = vadd.f32 0.0, %v1147
    %v1149 = vpop.f32.mrb[0].mxu0
    %v1150 = vpop.f32.mrb[0].mxu0
    %v1151 = vpop.f32.mrb[0].mxu0
    %1152 = vdwg.mxu0
    %v1153 = vsel %vm317, %v1148, -inf
    %1154 = vmax.xlane.f32.xlu0 %v1153
    %v1155 = vpop.xlane.xlu0 %1154
    %v1156 = vsub.f32 %v1148, %v1155
    %v1157 = vmul.f32 %v1156, 1.442695
    %v1158 = vpow.pop %v1157
    %v1159 = vsel %vm317, %v1158, 0.0
    %1160 = vadd.xlane.f32.xlu0 %v1159
    %v1161 = vpop.xlane.xlu0 %1160
    %v1162 = vpack.c.bf16 %v1158, %v1158
    %1163 = vrot.lane.b32.xlu0 %v771, 80
    %v1164 = vpop.permute.xlu0 %1163
    %v1167 = vsel %vm317, %v1162, 0
    %1169 = vmatprep.subr.bf16.mxu0 0
    %1170 = vmatpush1.bf16.msra.mxu0 %v1164
    %1171 = vmatprep.subr.bf16.mxu0 0
    %1172 = vmatpush1.bf16.msra.mxu0 0
    %1173 = vmatprep.subr.bf16.mxu0 0
    %1174 = vmatpush1.bf16.msra.mxu0 0
    %1175 = vmatprep.subr.bf16.mxu0 0
    %1176 = vmatpush1.bf16.msra.mxu0 0
    %1177 = vmatprep.subr.bf16.mxu0 0
    %1178 = vmatpush1.bf16.msra.mxu0 0
    %1179 = vmatprep.subr.bf16.mxu0 0
    %1180 = vmatpush1.bf16.msra.mxu0 0
    %1181 = vmatprep.subr.bf16.mxu0 0
    %1182 = vmatpush1.bf16.msra.mxu0 0
    %1183 = vmatprep.subr.bf16.mxu0 0
    %1184 = vmatpush1.bf16.msra.mxu0 0
    %1185 = vmatprep.subr.bf16.mxu0 0
    %1186 = vmatpush1.bf16.msra.mxu0 0
    %1187 = vmatprep.subr.bf16.mxu0 0
    %1188 = vmatpush1.bf16.msra.mxu0 0
    %1189 = vmatprep.subr.bf16.mxu0 0
    %1190 = vmatpush1.bf16.msra.mxu0 0
    %1191 = vmatprep.subr.bf16.mxu0 0
    %1192 = vmatpush1.bf16.msra.mxu0 0
    %1193 = vmatprep.subr.bf16.mxu0 0
    %1194 = vmatpush1.bf16.msra.mxu0 0
    %1195 = vmatprep.subr.bf16.mxu0 0
    %1196 = vmatpush1.bf16.msra.mxu0 0
    %1197 = vmatprep.subr.bf16.mxu0 0
    %1198 = vmatpush1.bf16.msra.mxu0 0
    %1199 = vmatprep.subr.bf16.mxu0 0
    %1200 = vmatpush1.bf16.msra.mxu0 0
    %1201 = vmatprep.mubr.bf16.mxu0 0
    %1202 = vmatmul.mubr.bf16.gmra.mrb[0].mxu0 %v1167
    %v1203 = vpop.f32.mrb[0].mxu0
    %v1204 = vadd.f32 0.0, %v1203
    %v1205 = vpop.f32.mrb[0].mxu0
    %v1206 = vpop.f32.mrb[0].mxu0
    %v1207 = vpop.f32.mrb[0].mxu0
    %1208 = vdwg.mxu0
    %v1209 = vrcp.pop %v1161
    %v1210 = vmul.f32 %v1204, %v1209
    %1212 = vrot.lane.b32.xlu0 %v1210, 48
    %v1213 = vpop.permute.xlu0 %1212
    %1215 = vst.msk [vmem:[#allocation2 + $0x8] sm:$0xff] %vm762, %v1213
    %v1216 = vld [vmem:[#allocation2] sm:$0xff]
    %v1217 = vld [vmem:[#allocation2 + $0x8] sm:$0xff]
    %v1218 = vpack.c.bf16 %v1217, %v1216
    %v1219 = vld [vmem:[%s6] sm:$0xf]
    %v1220 = vld [vmem:[%s6 + $0x4] sm:$0xf]
    %v1221 = vld [vmem:[%s6 + $0x8] sm:$0xf]
    %v1222 = vld [vmem:[%s6 + $0xc] sm:$0xf]
    %v1223 = vld [vmem:[%s6 + $0x10] sm:$0xf]
    %v1224 = vld [vmem:[%s6 + $0x14] sm:$0xf]
    %v1225 = vld [vmem:[%s6 + $0x18] sm:$0xf]
    %v1226 = vld [vmem:[%s6 + $0x1c] sm:$0xf]
    %v1227 = vld [vmem:[%s10] sm:$0x1]
    %v1229 = vlaneseq
    %v1230 = vshrl.u32 %v1229, 7
    %v1231 = vsub.s32 0, %v1230
    %v1232 = vrot.slane %v1227, %v1231
    %v1242 = vunpack.c.l.b16 %v1219
    %v1243 = vunpack.c.l.b16 %v1220
    %v1244 = vunpack.c.l.b16 %v1221
    %v1245 = vunpack.c.l.b16 %v1222
    %v1246 = vunpack.c.l.b16 %v1223
    %v1247 = vunpack.c.l.b16 %v1224
    %v1248 = vunpack.c.l.b16 %v1225
    %v1249 = vunpack.c.l.b16 %v1226
    %v1250 = vpack.c.b16 %v1243, %v1242
    %v1251 = vpack.c.b16 %v1245, %v1244
    %v1252 = vpack.c.b16 %v1247, %v1246
    %v1253 = vpack.c.b16 %v1249, %v1248
    %vm1258 = vcmask 523264
    %v1260 = vsel %vm1258, %v1218, 0
    %1262 = vmatprep.subr.bf16.mxu0 0
    %1263 = vmatpush1.bf16.msra.mxu0 %v1250
    %1264 = vmatprep.subr.bf16.mxu0 0
    %1265 = vmatpush1.bf16.msra.mxu0 %v1251
    %1266 = vmatprep.subr.bf16.mxu0 0
    %1267 = vmatpush1.bf16.msra.mxu0 %v1252
    %1268 = vmatprep.subr.bf16.mxu0 0
    %1269 = vmatpush1.bf16.msra.mxu0 %v1253
    %1270 = vmatprep.subr.bf16.mxu0 0
    %1271 = vmatpush1.bf16.msra.mxu0 0
    %1272 = vmatprep.subr.bf16.mxu0 0
    %1273 = vmatpush1.bf16.msra.mxu0 0
    %1274 = vmatprep.subr.bf16.mxu0 0
    %1275 = vmatpush1.bf16.msra.mxu0 0
    %1276 = vmatprep.subr.bf16.mxu0 0
    %1277 = vmatpush1.bf16.msra.mxu0 0
    %1278 = vmatprep.subr.bf16.mxu0 0
    %1279 = vmatpush1.bf16.msra.mxu0 0
    %1280 = vmatprep.subr.bf16.mxu0 0
    %1281 = vmatpush1.bf16.msra.mxu0 0
    %1282 = vmatprep.subr.bf16.mxu0 0
    %1283 = vmatpush1.bf16.msra.mxu0 0
    %1284 = vmatprep.subr.bf16.mxu0 0
    %1285 = vmatpush1.bf16.msra.mxu0 0
    %1286 = vmatprep.subr.bf16.mxu0 0
    %1287 = vmatpush1.bf16.msra.mxu0 0
    %1288 = vmatprep.subr.bf16.mxu0 0
    %1289 = vmatpush1.bf16.msra.mxu0 0
    %1290 = vmatprep.subr.bf16.mxu0 0
    %1291 = vmatpush1.bf16.msra.mxu0 0
    %1292 = vmatprep.subr.bf16.mxu0 0
    %1293 = vmatpush1.bf16.msra.mxu0 0
    %1294 = vmatprep.mubr.bf16.mxu0 0
    %1295 = vmatmul.mubr.bf16.gmra.mrb[0].mxu0 %v1260
    %v1296 = vpop.f32.mrb[0].mxu0
    %v1297 = vadd.f32 %v1232, %v1296
    %v1298 = vpop.f32.mrb[0].mxu0
    %v1299 = vpop.f32.mrb[0].mxu0
    %v1300 = vadd.f32 %v1232, %v1299
    %v1301 = vpop.f32.mrb[0].mxu0
    %1302 = vdwg.mxu0
    %1303 = vst.msk [vmem:[#allocation9] sm:$0xff] %vm119, %v1297
    %1304 = vst.msk [vmem:[#allocation9 + $0x8] sm:$0xff] %vm119, %v1300
    // Predicated region
    $region66: #{tpu_custom_call.1} parent=1 // pred_check
      _
    $region67: #{tpu_custom_call.1} parent=1 // pred_check_branch
      %1306 = sbr.rel (0) target = $region69
    $region68: #{tpu_custom_call.1} parent=1 // pred_region
      %s1308 = ssub.s32 256, 256
      %1309 = vsyncadd [#allocation5], %s1308
      %s1310 = sshll.u32 [#allocation9], 4
      %s1311 = int_to_ptr.vmem [resolvable:$true] %s1310
      %1316 = dma.vmem_to_hbm [thread:$0]  %s1311, 256, %s13, [#allocation5], 128, 128, 8
    $region69: #{tpu_custom_call.1} parent=1 // pred_fallthru
      _
    // Predicated region
    $region70: #{tpu_custom_call.1} parent=1 // pred_check
      _
    $region71: #{tpu_custom_call.1} parent=1 // pred_check_branch
      %1318 = sbr.rel (0) target = $region73
    $region72: #{tpu_custom_call.1} parent=1 // pred_region
      %1319 = dma.done [#allocation5], 256
    $region73: #{tpu_custom_call.1} parent=1 // pred_fallthru
      _
    %1320 = vsyncpa [#allocation4], 1
    %1321 = vsyncpa [#allocation7], 1
    %1322 = vsyncpa [#allocation5], 1

</llo_original>
